<compile_context>
chip_gen: v5e
topology: v5e:2x2
jax: 0.10.0
libtpu: 0.0.40
codegen_flags: <defaults>
</compile_context>

<pallas_src>
import functools

import jax
import jax.numpy as jnp
from jax import lax
from jax.experimental import pallas as pl
from jax.experimental.pallas import tpu as pltpu

LARGE_NUM = 1.0e9
_NORM_EPS = 1e-12


def _icl_loss_kernel(q_ref, kt_ref, out_ref, *, tau, alpha, inversion,
                     n_valid, tile_m, b_pad, matmul_dtype):
    TM = tile_m
    start = pl.program_id(0) * TM                 # first batch row of this tile

    q = q_ref[...]                                # (2*TM, D): [h1 tile ; h2 tile]
    q1 = q[:TM]                                   # (TM, D)
    q2 = q[TM:]                                   # (TM, D)

    inv_tau = 1.0 / tau
    # Positive logit: logits_ab[i,i] == logits_ba[i,i] == <h1_i, h2_i>/tau.
    pos = jnp.sum(q1 * q2, axis=1, keepdims=True) * inv_tau       # (TM, 1)

    # Single fused MXU matmul: M = 2*TM, K = D, N = 2*b_pad.
    qm = (q * inv_tau).astype(matmul_dtype)
    km = kt_ref[...].astype(matmul_dtype)         # (D, 2*b_pad): [h1 | h2] keys
    strip = jnp.dot(qm, km, preferred_element_type=jnp.float32)   # (2TM, 2Bp)

    AA = strip[:TM, :b_pad]                       # h1_i . h1_j / tau
    AB = strip[:TM, b_pad:]                       # h1_i . h2_j / tau
    BA = strip[TM:, :b_pad]                       # h2_i . h1_j / tau
    BB = strip[TM:, b_pad:]                       # h2_i . h2_j / tau

    cross_a, cross_b = AB, BA
    intra_a, intra_b = (BB, AA) if inversion else (AA, BB)

    col = lax.broadcasted_iota(jnp.int32, (1, b_pad), 1)
    row = start + lax.broadcasted_iota(jnp.int32, (TM, 1), 0)
    not_diag = col != row                         # (TM, b_pad) bool
    if n_valid != b_pad:                          # mask padded key columns
        col_ok = col < n_valid
        intra_mask = jnp.logical_and(col_ok, not_diag)
        cross_a = jnp.where(col_ok, cross_a, -LARGE_NUM)
        cross_b = jnp.where(col_ok, cross_b, -LARGE_NUM)
    else:
        intra_mask = not_diag
    intra_a = jnp.where(intra_mask, intra_a, -LARGE_NUM)
    intra_b = jnp.where(intra_mask, intra_b, -LARGE_NUM)

    def pair_lse(x, y):
        # Row-wise logsumexp over concat([x, y], axis=1) without materializing
        # the concatenation.
        m = jnp.maximum(jnp.max(x, axis=1, keepdims=True),
                        jnp.max(y, axis=1, keepdims=True))
        s = (jnp.sum(jnp.exp(x - m), axis=1, keepdims=True)
             + jnp.sum(jnp.exp(y - m), axis=1, keepdims=True))
        return m + jnp.log(s)

    lse_a = pair_lse(cross_a, intra_a)            # (TM, 1)
    lse_b = pair_lse(cross_b, intra_b)            # (TM, 1)

    row_ok = row < n_valid                        # mask padded query rows
    la = jnp.sum(jnp.where(row_ok, lse_a - pos, 0.0))
    lb = jnp.sum(jnp.where(row_ok, lse_b - pos, 0.0))
    partial = (alpha * la + (1.0 - alpha) * lb) * (1.0 / n_valid)
    out_ref[...] = jnp.broadcast_to(partial, out_ref.shape)


def _pick_tile_m(b_pad):
    # Largest tile whose (2*TM, 2*B_pad) f32 strip stays <= 8 MiB.
    for tm in (512, 256, 128):
        if b_pad % tm == 0 and (2 * tm) * (2 * b_pad) * 4 <= (8 << 20):
            return tm
    return 128  # b_pad is always a multiple of 128


def icl_loss(emb, train_links, *, tau=0.05, modal_weight=0.5, inversion=False,
             norm=True, matmul_dtype=jnp.float32, tile_m=None):
    """emb: (N, D) float; train_links: (B, 2) int. Returns scalar f32 loss."""
    emb = emb.astype(jnp.float32)
    train_links = train_links.astype(jnp.int32)
    B = int(train_links.shape[0])
    D = int(emb.shape[1])

    # Gather + L2-normalize in XLA (memory-bound; fuses with the gather).
    idx = jnp.concatenate([train_links[:, 0], train_links[:, 1]])
    h = emb[idx]                                              # (2B, D)
    if norm:
        ss = jnp.sum(h * h, axis=1, keepdims=True)
        h = h * lax.rsqrt(jnp.maximum(ss, _NORM_EPS * _NORM_EPS))

    # Pad the batch to a lane-dense multiple of 128 (masked in-kernel).
    B_pad = max(128, -(-B // 128) * 128)
    z = jnp.zeros((2, B_pad, D), jnp.float32).at[:, :B, :].set(h.reshape(2, B, D))

    if tile_m is None:
        tile_m = _pick_tile_m(B_pad)
    assert B_pad % tile_m == 0, (B_pad, tile_m)
    num_tiles = B_pad // tile_m

    # Keys: block-ordered [h1 ; h2], pre-transposed to (D, 2*B_pad) so the MXU
    # sees the canonical (M,K)@(K,N) orientation.  Queries: tile-interleaved so
    # each grid step reads ONE contiguous (2*TM, D) slab holding its h1 and h2
    # rows (a-side rows first, then b-side rows).
    kt_arr = z.reshape(2 * B_pad, D).T                        # (D, 2*B_pad)
    q_arr = jnp.transpose(z.reshape(2, num_tiles, tile_m, D),
                          (1, 0, 2, 3)).reshape(2 * B_pad, D)

    kernel = functools.partial(
        _icl_loss_kernel, tau=float(tau), alpha=float(modal_weight),
        inversion=bool(inversion), n_valid=B, tile_m=tile_m, b_pad=B_pad,
        matmul_dtype=matmul_dtype)

    flops = 2 * (2 * B_pad) * (2 * B_pad) * D + 16 * B_pad * B_pad
    transcendentals = 4 * B_pad * B_pad + 4 * B_pad
    bytes_accessed = (2 * (2 * B_pad) * D + num_tiles * 8 * 128) * 4

    # Raise the scoped-VMEM limit only if the per-tile footprint needs it
    # (never triggers at small B; keeps defaults, which are always safe).
    strip_bytes = (2 * tile_m) * (2 * B_pad) * 4
    est = (2 * (2 * B_pad) * D * 4 + 2 * (2 * tile_m) * D * 4
           + 6 * strip_bytes + (1 << 20))
    cp_kwargs = dict(dimension_semantics=("parallel",))
    if est > (16 << 20):
        cp_kwargs["vmem_limit_bytes"] = int(min(max(est, 32 << 20), 56 << 20))

    out = pl.pallas_call(
        kernel,
        out_shape=jax.ShapeDtypeStruct((num_tiles, 8, 128), jnp.float32),
        grid=(num_tiles,),
        in_specs=[pl.BlockSpec((2 * tile_m, D), lambda t: (t, 0)),
                  pl.BlockSpec((D, 2 * B_pad), lambda t: (0, 0))],
        out_specs=pl.BlockSpec((1, 8, 128), lambda t: (t, 0, 0)),
        compiler_params=pltpu.CompilerParams(**cp_kwargs),
        cost_estimate=pl.CostEstimate(flops=flops,
                                      transcendentals=transcendentals,
                                      bytes_accessed=bytes_accessed),
    )(q_arr, kt_arr)
    return out[:, 0, 0].sum()


def icl_loss_reference(emb, train_links, *, tau=0.05, modal_weight=0.5,
                       inversion=False, norm=True):
    """Pure-JAX transcription of IclLoss.forward (neg_l=None path)."""
    emb = emb.astype(jnp.float32)
    if norm:
        n = jnp.linalg.norm(emb, axis=1, keepdims=True)
        emb = emb / jnp.maximum(n, _NORM_EPS)
    zis = emb[train_links[:, 0]]
    zjs = emb[train_links[:, 1]]
    B = zis.shape[0]
    hp = lax.Precision.HIGHEST
    masks = jnp.eye(B, dtype=jnp.float32)
    logits_aa = jnp.matmul(zis, zis.T, precision=hp) / tau - masks * LARGE_NUM
    logits_bb = jnp.matmul(zjs, zjs.T, precision=hp) / tau - masks * LARGE_NUM
    logits_ab = jnp.matmul(zis, zjs.T, precision=hp) / tau
    logits_ba = jnp.matmul(zjs, zis.T, precision=hp) / tau
    if inversion:
        logits_a = jnp.concatenate([logits_ab, logits_bb], axis=1)
        logits_b = jnp.concatenate([logits_ba, logits_aa], axis=1)
    else:
        logits_a = jnp.concatenate([logits_ab, logits_aa], axis=1)
        logits_b = jnp.concatenate([logits_ba, logits_bb], axis=1)
    labels = jax.nn.one_hot(jnp.arange(B), 2 * B, dtype=jnp.float32)

    def soft_xent(target, logits):
        logp = jax.nn.log_softmax(logits, axis=1)
        return -(target * logp).sum() / logits.shape[0]

    return (modal_weight * soft_xent(labels, logits_a)
            + (1.0 - modal_weight) * soft_xent(labels, logits_b))


if __name__ == "__main__":
    root = jax.random.PRNGKey(0)

    def check(N, B, D, *, tau, alpha, inversion, tile_m=None, tol=1e-3):
        k1, k2 = jax.random.split(jax.random.fold_in(root, 131 * N + B))
        emb = jax.random.normal(k1, (N, D), dtype=jnp.float32)
        links = jax.random.randint(k2, (B, 2), 0, N, dtype=jnp.int32)
        got = jax.block_until_ready(
            icl_loss(emb, links, tau=tau, modal_weight=alpha,
                     inversion=inversion, tile_m=tile_m))
        want = icl_loss_reference(emb, links, tau=tau, modal_weight=alpha,
                                  inversion=inversion)
        assert jnp.isfinite(got), got
        assert jnp.allclose(got, want, rtol=tol, atol=tol), (got, want)

    # Canonical small example: B=8 links padded to 128, single tile.
    check(32, 8, 128, tau=0.05, alpha=0.5, inversion=False)
    # Inversion path with asymmetric modal weight.
    check(32, 8, 128, tau=0.05, alpha=0.7, inversion=True)
    # Lane-exact batch (no padding) exercising a 2-tile grid.
    check(512, 256, 128, tau=0.05, alpha=0.5, inversion=False, tile_m=128)

    print("KERNEL_OK")
</pallas_src>

<mosaic_0001>
module attributes {stable_mosaic.version = 11 : i64} {
  func.func @_icl_loss_kernel(%arg0: i32, %arg1: memref<256x128xf32, #tpu.memory_space<vmem>>, %arg2: memref<128x256xf32, #tpu.memory_space<vmem>>, %arg3: memref<1x8x128xf32, #tpu.memory_space<vmem>>) attributes {dimension_semantics = [#tpu.dimension_semantics<parallel>], iteration_bounds = array<i64: 1>, scalar_prefetch = 0 : i64, scratch_operands = 0 : i64, tpu.core_type = #tpu.core_type<tc>, window_params = [{transform_indices = @transform_0, window_bounds = array<i64: 256, 128>}, {pipeline_mode = #tpu.pipeline_mode<synchronous>, transform_indices = @transform_1, window_bounds = array<i64: 128, 256>}, {transform_indices = @transform_2, window_bounds = array<i64: 1, 8, 128>}]} {
    %c128_i32 = arith.constant 128 : i32
    %0 = arith.muli %arg0, %c128_i32 : i32
    %c0 = arith.constant 0 : index
    %c0_0 = arith.constant 0 : index
    %1 = vector.load %arg1[%c0, %c0_0] : memref<256x128xf32, #tpu.memory_space<vmem>>, vector<256x128xf32>
    %2 = vector.extract_strided_slice %1 {offsets = [0, 0], sizes = [128, 128], strides = [1, 1]} : vector<256x128xf32> to vector<128x128xf32>
    %3 = vector.extract_strided_slice %1 {offsets = [128, 0], sizes = [128, 128], strides = [1, 1]} : vector<256x128xf32> to vector<128x128xf32>
    %4 = arith.mulf %2, %3 : vector<128x128xf32>
    %cst = arith.constant dense<0.000000e+00> : vector<128xf32>
    %5 = vector.multi_reduction <add>, %4, %cst [1] : vector<128x128xf32> to vector<128xf32>
    %6 = vector.shape_cast %5 : vector<128xf32> to vector<128x1xf32>
    %cst_1 = arith.constant 2.000000e+01 : f32
    %7 = vector.broadcast %cst_1 : f32 to vector<128x1xf32>
    %8 = arith.mulf %6, %7 : vector<128x1xf32>
    %cst_2 = arith.constant 2.000000e+01 : f32
    %9 = vector.broadcast %cst_2 : f32 to vector<256x128xf32>
    %10 = arith.mulf %1, %9 : vector<256x128xf32>
    %c0_3 = arith.constant 0 : index
    %c0_4 = arith.constant 0 : index
    %11 = vector.load %arg2[%c0_3, %c0_4] : memref<128x256xf32, #tpu.memory_space<vmem>>, vector<128x256xf32>
    %cst_5 = arith.constant dense<0.000000e+00> : vector<256x256xf32>
    %12 = tpu.matmul %10, %11, %cst_5 {dimension_numbers = #tpu.dot_dimension_numbers<[1], [0], [0], [1], [0, 0, 1, 1], [], []>} : vector<256x128xf32>, vector<128x256xf32>, vector<256x256xf32> -> vector<256x256xf32>
    %13 = vector.extract_strided_slice %12 {offsets = [0, 0], sizes = [128, 128], strides = [1, 1]} : vector<256x256xf32> to vector<128x128xf32>
    %14 = vector.extract_strided_slice %12 {offsets = [0, 128], sizes = [128, 128], strides = [1, 1]} : vector<256x256xf32> to vector<128x128xf32>
    %15 = vector.extract_strided_slice %12 {offsets = [128, 0], sizes = [128, 128], strides = [1, 1]} : vector<256x256xf32> to vector<128x128xf32>
    %16 = vector.extract_strided_slice %12 {offsets = [128, 128], sizes = [128, 128], strides = [1, 1]} : vector<256x256xf32> to vector<128x128xf32>
    %17 = tpu.iota {dimensions = array<i32: 1>} : vector<1x128xi32>
    %18 = tpu.iota {dimensions = array<i32: 0>} : vector<128x1xi32>
    %19 = vector.broadcast %0 : i32 to vector<128x1xi32>
    %20 = arith.addi %19, %18 : vector<128x1xi32>
    %21 = vector.broadcast %17 : vector<1x128xi32> to vector<128x128xi32>
    %22 = vector.broadcast %20 : vector<128x1xi32> to vector<128x128xi32>
    %23 = arith.cmpi ne, %21, %22 : vector<128x128xi32>
    %c8_i32 = arith.constant 8 : i32
    %24 = vector.broadcast %c8_i32 : i32 to vector<1x128xi32>
    %25 = arith.cmpi slt, %17, %24 : vector<1x128xi32>
    %26 = vector.broadcast %25 : vector<1x128xi1> to vector<128x128xi1>
    %27 = arith.andi %26, %23 : vector<128x128xi1>
    %cst_6 = arith.constant -1.000000e+09 : f32
    %28 = vector.shape_cast %25 : vector<1x128xi1> to vector<1x128xi1>
    %29 = vector.broadcast %28 : vector<1x128xi1> to vector<128x128xi1>
    %30 = vector.broadcast %cst_6 : f32 to vector<128x128xf32>
    %31 = arith.select %29, %14, %30 : vector<128x128xi1>, vector<128x128xf32>
    %cst_7 = arith.constant -1.000000e+09 : f32
    %32 = vector.shape_cast %25 : vector<1x128xi1> to vector<1x128xi1>
    %33 = vector.broadcast %32 : vector<1x128xi1> to vector<128x128xi1>
    %34 = vector.broadcast %cst_7 : f32 to vector<128x128xf32>
    %35 = arith.select %33, %15, %34 : vector<128x128xi1>, vector<128x128xf32>
    %cst_8 = arith.constant -1.000000e+09 : f32
    %36 = vector.broadcast %cst_8 : f32 to vector<128x128xf32>
    %37 = arith.select %27, %13, %36 : vector<128x128xi1>, vector<128x128xf32>
    %cst_9 = arith.constant -1.000000e+09 : f32
    %38 = vector.broadcast %cst_9 : f32 to vector<128x128xf32>
    %39 = arith.select %27, %16, %38 : vector<128x128xi1>, vector<128x128xf32>
    %cst_10 = arith.constant dense<0xFF800000> : vector<128xf32>
    %40 = vector.multi_reduction <maximumf>, %31, %cst_10 [1] : vector<128x128xf32> to vector<128xf32>
    %41 = vector.shape_cast %40 : vector<128xf32> to vector<128x1xf32>
    %cst_11 = arith.constant dense<0xFF800000> : vector<128xf32>
    %42 = vector.multi_reduction <maximumf>, %37, %cst_11 [1] : vector<128x128xf32> to vector<128xf32>
    %43 = vector.shape_cast %42 : vector<128xf32> to vector<128x1xf32>
    %44 = arith.maximumf %41, %43 : vector<128x1xf32>
    %45 = vector.broadcast %44 : vector<128x1xf32> to vector<128x128xf32>
    %46 = arith.subf %31, %45 : vector<128x128xf32>
    %47 = math.exp %46 : vector<128x128xf32>
    %cst_12 = arith.constant dense<0.000000e+00> : vector<128xf32>
    %48 = vector.multi_reduction <add>, %47, %cst_12 [1] : vector<128x128xf32> to vector<128xf32>
    %49 = vector.shape_cast %48 : vector<128xf32> to vector<128x1xf32>
    %50 = vector.broadcast %44 : vector<128x1xf32> to vector<128x128xf32>
    %51 = arith.subf %37, %50 : vector<128x128xf32>
    %52 = math.exp %51 : vector<128x128xf32>
    %cst_13 = arith.constant dense<0.000000e+00> : vector<128xf32>
    %53 = vector.multi_reduction <add>, %52, %cst_13 [1] : vector<128x128xf32> to vector<128xf32>
    %54 = vector.shape_cast %53 : vector<128xf32> to vector<128x1xf32>
    %55 = arith.addf %49, %54 : vector<128x1xf32>
    %56 = math.log %55 : vector<128x1xf32>
    %57 = arith.addf %44, %56 : vector<128x1xf32>
    %cst_14 = arith.constant dense<0xFF800000> : vector<128xf32>
    %58 = vector.multi_reduction <maximumf>, %35, %cst_14 [1] : vector<128x128xf32> to vector<128xf32>
    %59 = vector.shape_cast %58 : vector<128xf32> to vector<128x1xf32>
    %cst_15 = arith.constant dense<0xFF800000> : vector<128xf32>
    %60 = vector.multi_reduction <maximumf>, %39, %cst_15 [1] : vector<128x128xf32> to vector<128xf32>
    %61 = vector.shape_cast %60 : vector<128xf32> to vector<128x1xf32>
    %62 = arith.maximumf %59, %61 : vector<128x1xf32>
    %63 = vector.broadcast %62 : vector<128x1xf32> to vector<128x128xf32>
    %64 = arith.subf %35, %63 : vector<128x128xf32>
    %65 = math.exp %64 : vector<128x128xf32>
    %cst_16 = arith.constant dense<0.000000e+00> : vector<128xf32>
    %66 = vector.multi_reduction <add>, %65, %cst_16 [1] : vector<128x128xf32> to vector<128xf32>
    %67 = vector.shape_cast %66 : vector<128xf32> to vector<128x1xf32>
    %68 = vector.broadcast %62 : vector<128x1xf32> to vector<128x128xf32>
    %69 = arith.subf %39, %68 : vector<128x128xf32>
    %70 = math.exp %69 : vector<128x128xf32>
    %cst_17 = arith.constant dense<0.000000e+00> : vector<128xf32>
    %71 = vector.multi_reduction <add>, %70, %cst_17 [1] : vector<128x128xf32> to vector<128xf32>
    %72 = vector.shape_cast %71 : vector<128xf32> to vector<128x1xf32>
    %73 = arith.addf %67, %72 : vector<128x1xf32>
    %74 = math.log %73 : vector<128x1xf32>
    %75 = arith.addf %62, %74 : vector<128x1xf32>
    %c8_i32_18 = arith.constant 8 : i32
    %76 = vector.broadcast %c8_i32_18 : i32 to vector<128x1xi32>
    %77 = arith.cmpi slt, %20, %76 : vector<128x1xi32>
    %78 = arith.subf %57, %8 : vector<128x1xf32>
    %cst_19 = arith.constant 0.000000e+00 : f32
    %79 = vector.broadcast %cst_19 : f32 to vector<128x1xf32>
    %80 = arith.select %77, %78, %79 : vector<128x1xi1>, vector<128x1xf32>
    %81 = vector.shape_cast %80 : vector<128x1xf32> to vector<1x128x1xf32>
    %cst_20 = arith.constant dense<0.000000e+00> : vector<1xf32>
    %82 = vector.multi_reduction <add>, %81, %cst_20 [1, 2] : vector<1x128x1xf32> to vector<1xf32>
    %83 = vector.shape_cast %82 : vector<1xf32> to vector<1x1x1xf32>
    %84 = vector.extract %83[0, 0, 0] : f32 from vector<1x1x1xf32>
    %85 = arith.subf %75, %8 : vector<128x1xf32>
    %cst_21 = arith.constant 0.000000e+00 : f32
    %86 = vector.broadcast %cst_21 : f32 to vector<128x1xf32>
    %87 = arith.select %77, %85, %86 : vector<128x1xi1>, vector<128x1xf32>
    %88 = vector.shape_cast %87 : vector<128x1xf32> to vector<1x128x1xf32>
    %cst_22 = arith.constant dense<0.000000e+00> : vector<1xf32>
    %89 = vector.multi_reduction <add>, %88, %cst_22 [1, 2] : vector<1x128x1xf32> to vector<1xf32>
    %90 = vector.shape_cast %89 : vector<1xf32> to vector<1x1x1xf32>
    %91 = vector.extract %90[0, 0, 0] : f32 from vector<1x1x1xf32>
    %cst_23 = arith.constant 5.000000e-01 : f32
    %92 = arith.mulf %cst_23, %84 : f32
    %cst_24 = arith.constant 5.000000e-01 : f32
    %93 = arith.mulf %cst_24, %91 : f32
    %94 = arith.addf %92, %93 : f32
    %cst_25 = arith.constant 1.250000e-01 : f32
    %95 = arith.mulf %94, %cst_25 : f32
    %96 = vector.broadcast %95 : f32 to vector<1x8x128xf32>
    %c0_26 = arith.constant 0 : index
    %c0_27 = arith.constant 0 : index
    %c0_28 = arith.constant 0 : index
    %97 = vector.load %arg3[%c0_26, %c0_27, %c0_28] : memref<1x8x128xf32, #tpu.memory_space<vmem>>, vector<1x8x128xf32>
    tpu.vector_store %arg3[%c0_26, %c0_27, %c0_28], %96 {strides = array<i32>} : memref<1x8x128xf32, #tpu.memory_space<vmem>>, vector<1x8x128xf32>,
    return
  }
  func.func @transform_0(%arg0: i32) -> (i32, i32) {
    %c0_i32 = arith.constant 0 : i32
    %c0_i32_0 = arith.constant 0 : i32
    return %arg0, %c0_i32 : i32, i32
  }
  func.func @transform_1(%arg0: i32) -> (i32, i32) {
    %c0_i32 = arith.constant 0 : i32
    %c0_i32_0 = arith.constant 0 : i32
    %c0_i32_1 = arith.constant 0 : i32
    return %c0_i32, %c0_i32_0 : i32, i32
  }
  func.func @transform_2(%arg0: i32) -> (i32, i32, i32) {
    %c0_i32 = arith.constant 0 : i32
    %c0_i32_0 = arith.constant 0 : i32
    %c0_i32_1 = arith.constant 0 : i32
    return %arg0, %c0_i32, %c0_i32_0 : i32, i32, i32
  }
}

</mosaic_0001>

<llo_original>
// kernel: tpu_custom_call.1
$region0: #{tpu_custom_call.1}
  #allocation0 [shape = 'u32[]', space=smem, size = 0x4, offset = 0x4, fixed_abs, tag = 'smem constant byte address 0x4 - core index']
  #allocation1 [shape = 'u32[72,128]{1,0:T(1,128)}', space=vmem, size = 0x9000, scoped, tag = 'internal scratch']
  %s0 = inlined_call_operand.hbm [shape: f32[256,128], index: 0, kind: input, shape index: {}]
  %s1 = inlined_call_operand.hbm [shape: f32[128,256], index: 1, kind: input, shape index: {}]
  %s2 = inlined_call_operand.hbm [shape: f32[1,8,128], index: 2, kind: output, shape index: {}]
  %s3 = sld [smem:[#allocation0]]
  $region26: #{tpu_custom_call.1} parent=0
    _
  %s5 = ssub.s32 1, %s3
  %s6 = scalar_select 0, %s5, %s3
  $region1: #{tpu_custom_call.1} parent=0
    #allocation2 [shape = 'u8[131072]{0}', space=vmem, size = 0x20000, scoped, tag = 'input window, operand 0, single buffered']
    #allocation3 [shape = 's32[1]{0}', space=sflag, size = 0x4, scoped, tag = 'scoped memory for tpu_custom_call.1']
    #allocation4 [shape = 's32[1]{0}', space=sflag, size = 0x4, scoped, tag = 'scoped memory for tpu_custom_call.1']
    #allocation5 [shape = 'u8[131072]{0}', space=vmem, size = 0x20000, scoped, tag = 'input window, operand 1, single buffered']
    #allocation6 [shape = 's32[1]{0}', space=sflag, size = 0x4, scoped, tag = 'scoped memory for tpu_custom_call.1']
    #allocation7 [shape = 'u8[4096]{0}', space=vmem, size = 0x1000, scoped, tag = 'output window, operand 0, single buffered']
    %7 = vsyncpa [#allocation3], 0
    %8 = vsyncpa [#allocation6], 0
    %9 = vsyncpa [#allocation4], 0
    // Predicated region
    $region2: #{tpu_custom_call.1} parent=1 // pred_check
      _
    $region3: #{tpu_custom_call.1} parent=1 // pred_check_branch
      %11 = sbr.rel (0) target = $region5
    $region4: #{tpu_custom_call.1} parent=1 // pred_region
      %13 = vsyncadd [#allocation3], 0
      %s14 = sshll.u32 %s0, 4
      %s15 = int_to_ptr.hbm [resolvable:$true] %s14
      %s16 = sshll.u32 [#allocation2], 4
      %s17 = int_to_ptr.vmem [resolvable:$true] %s16
      %22 = dma.hbm_to_vmem [thread:$0]  %s15, 4096, %s17, [#allocation3], 128, 128, 8
    $region5: #{tpu_custom_call.1} parent=1 // pred_fallthru
      _
    // Predicated region
    $region6: #{tpu_custom_call.1} parent=1 // pred_check
      _
    $region7: #{tpu_custom_call.1} parent=1 // pred_check_branch
      %24 = sbr.rel (0) target = $region9
    $region8: #{tpu_custom_call.1} parent=1 // pred_region
      %26 = vsyncadd [#allocation6], 0
      %s27 = sshll.u32 %s1, 4
      %s28 = int_to_ptr.hbm [resolvable:$true] %s27
      %s29 = sshll.u32 [#allocation5], 4
      %s30 = int_to_ptr.vmem [resolvable:$true] %s29
      %35 = dma.hbm_to_vmem [thread:$0]  %s28, 4096, %s30, [#allocation6], 256, 256, 16
    $region9: #{tpu_custom_call.1} parent=1 // pred_fallthru
      _
    // Predicated region
    $region10: #{tpu_custom_call.1} parent=1 // pred_check
      _
    $region11: #{tpu_custom_call.1} parent=1 // pred_check_branch
      %37 = sbr.rel (0) target = $region13
    $region12: #{tpu_custom_call.1} parent=1 // pred_region
      %39 = dma.done [#allocation3], 4096
    $region13: #{tpu_custom_call.1} parent=1 // pred_fallthru
      _
    // Predicated region
    $region14: #{tpu_custom_call.1} parent=1 // pred_check
      _
    $region15: #{tpu_custom_call.1} parent=1 // pred_check_branch
      %41 = sbr.rel (0) target = $region17
    $region16: #{tpu_custom_call.1} parent=1 // pred_region
      %43 = dma.done [#allocation6], 4096
    $region17: #{tpu_custom_call.1} parent=1 // pred_fallthru
      _
    %s44 = smul.u32 0, 128
    %v45 = vld [vmem:[#allocation2] sm:$0xff]
    %v46 = vld [vmem:[#allocation2 + $0x8] sm:$0xff]
    %v47 = vld [vmem:[#allocation2 + $0x10] sm:$0xff]
    %v48 = vld [vmem:[#allocation2 + $0x18] sm:$0xff]
    %v49 = vld [vmem:[#allocation2 + $0x20] sm:$0xff]
    %v50 = vld [vmem:[#allocation2 + $0x28] sm:$0xff]
    %v51 = vld [vmem:[#allocation2 + $0x30] sm:$0xff]
    %v52 = vld [vmem:[#allocation2 + $0x38] sm:$0xff]
    %v53 = vld [vmem:[#allocation2 + $0x40] sm:$0xff]
    %v54 = vld [vmem:[#allocation2 + $0x48] sm:$0xff]
    %v55 = vld [vmem:[#allocation2 + $0x50] sm:$0xff]
    %v56 = vld [vmem:[#allocation2 + $0x58] sm:$0xff]
    %v57 = vld [vmem:[#allocation2 + $0x60] sm:$0xff]
    %v58 = vld [vmem:[#allocation2 + $0x68] sm:$0xff]
    %v59 = vld [vmem:[#allocation2 + $0x70] sm:$0xff]
    %v60 = vld [vmem:[#allocation2 + $0x78] sm:$0xff]
    %v61 = vld [vmem:[#allocation2 + $0x80] sm:$0xff]
    %v62 = vld [vmem:[#allocation2 + $0x88] sm:$0xff]
    %v63 = vld [vmem:[#allocation2 + $0x90] sm:$0xff]
    %v64 = vld [vmem:[#allocation2 + $0x98] sm:$0xff]
    %v65 = vld [vmem:[#allocation2 + $0xa0] sm:$0xff]
    %v66 = vld [vmem:[#allocation2 + $0xa8] sm:$0xff]
    %v67 = vld [vmem:[#allocation2 + $0xb0] sm:$0xff]
    %v68 = vld [vmem:[#allocation2 + $0xb8] sm:$0xff]
    %v69 = vld [vmem:[#allocation2 + $0xc0] sm:$0xff]
    %v70 = vld [vmem:[#allocation2 + $0xc8] sm:$0xff]
    %v71 = vld [vmem:[#allocation2 + $0xd0] sm:$0xff]
    %v72 = vld [vmem:[#allocation2 + $0xd8] sm:$0xff]
    %v73 = vld [vmem:[#allocation2 + $0xe0] sm:$0xff]
    %v74 = vld [vmem:[#allocation2 + $0xe8] sm:$0xff]
    %v75 = vld [vmem:[#allocation2 + $0xf0] sm:$0xff]
    %v76 = vld [vmem:[#allocation2 + $0xf8] sm:$0xff]
    %v77 = vmul.f32 %v45, %v61
    %v78 = vmul.f32 %v46, %v62
    %v79 = vmul.f32 %v47, %v63
    %v80 = vmul.f32 %v48, %v64
    %v81 = vmul.f32 %v49, %v65
    %v82 = vmul.f32 %v50, %v66
    %v83 = vmul.f32 %v51, %v67
    %v84 = vmul.f32 %v52, %v68
    %v85 = vmul.f32 %v53, %v69
    %v86 = vmul.f32 %v54, %v70
    %v87 = vmul.f32 %v55, %v71
    %v88 = vmul.f32 %v56, %v72
    %v89 = vmul.f32 %v57, %v73
    %v90 = vmul.f32 %v58, %v74
    %v91 = vmul.f32 %v59, %v75
    %v92 = vmul.f32 %v60, %v76
    %93 = vadd.xlane.f32.xlu0 %v77
    %v94 = vpop.xlane.xlu0 %93
    %95 = vadd.xlane.f32.xlu0 %v78
    %v96 = vpop.xlane.xlu0 %95
    %97 = vadd.xlane.f32.xlu0 %v79
    %v98 = vpop.xlane.xlu0 %97
    %99 = vadd.xlane.f32.xlu0 %v80
    %v100 = vpop.xlane.xlu0 %99
    %101 = vadd.xlane.f32.xlu0 %v81
    %v102 = vpop.xlane.xlu0 %101
    %103 = vadd.xlane.f32.xlu0 %v82
    %v104 = vpop.xlane.xlu0 %103
    %105 = vadd.xlane.f32.xlu0 %v83
    %v106 = vpop.xlane.xlu0 %105
    %107 = vadd.xlane.f32.xlu0 %v84
    %v108 = vpop.xlane.xlu0 %107
    %109 = vadd.xlane.f32.xlu0 %v85
    %v110 = vpop.xlane.xlu0 %109
    %111 = vadd.xlane.f32.xlu0 %v86
    %v112 = vpop.xlane.xlu0 %111
    %113 = vadd.xlane.f32.xlu0 %v87
    %v114 = vpop.xlane.xlu0 %113
    %115 = vadd.xlane.f32.xlu0 %v88
    %v116 = vpop.xlane.xlu0 %115
    %117 = vadd.xlane.f32.xlu0 %v89
    %v118 = vpop.xlane.xlu0 %117
    %119 = vadd.xlane.f32.xlu0 %v90
    %v120 = vpop.xlane.xlu0 %119
    %121 = vadd.xlane.f32.xlu0 %v91
    %v122 = vpop.xlane.xlu0 %121
    %123 = vadd.xlane.f32.xlu0 %v92
    %v124 = vpop.xlane.xlu0 %123
    %v125 = vmul.f32 %v94, 20.0
    %v126 = vmul.f32 %v96, 20.0
    %v127 = vmul.f32 %v98, 20.0
    %v128 = vmul.f32 %v100, 20.0
    %v129 = vmul.f32 %v102, 20.0
    %v130 = vmul.f32 %v104, 20.0
    %v131 = vmul.f32 %v106, 20.0
    %v132 = vmul.f32 %v108, 20.0
    %v133 = vmul.f32 %v110, 20.0
    %v134 = vmul.f32 %v112, 20.0
    %v135 = vmul.f32 %v114, 20.0
    %v136 = vmul.f32 %v116, 20.0
    %v137 = vmul.f32 %v118, 20.0
    %v138 = vmul.f32 %v120, 20.0
    %v139 = vmul.f32 %v122, 20.0
    %v140 = vmul.f32 %v124, 20.0
    %v141 = vmul.f32 %v45, 20.0
    %v142 = vmul.f32 %v46, 20.0
    %v143 = vmul.f32 %v47, 20.0
    %v144 = vmul.f32 %v48, 20.0
    %v145 = vmul.f32 %v49, 20.0
    %v146 = vmul.f32 %v50, 20.0
    %v147 = vmul.f32 %v51, 20.0
    %v148 = vmul.f32 %v52, 20.0
    %v149 = vmul.f32 %v53, 20.0
    %v150 = vmul.f32 %v54, 20.0
    %v151 = vmul.f32 %v55, 20.0
    %v152 = vmul.f32 %v56, 20.0
    %v153 = vmul.f32 %v57, 20.0
    %v154 = vmul.f32 %v58, 20.0
    %v155 = vmul.f32 %v59, 20.0
    %v156 = vmul.f32 %v60, 20.0
    %v157 = vmul.f32 %v61, 20.0
    %v158 = vmul.f32 %v62, 20.0
    %v159 = vmul.f32 %v63, 20.0
    %v160 = vmul.f32 %v64, 20.0
    %v161 = vmul.f32 %v65, 20.0
    %v162 = vmul.f32 %v66, 20.0
    %v163 = vmul.f32 %v67, 20.0
    %v164 = vmul.f32 %v68, 20.0
    %v165 = vmul.f32 %v69, 20.0
    %v166 = vmul.f32 %v70, 20.0
    %v167 = vmul.f32 %v71, 20.0
    %v168 = vmul.f32 %v72, 20.0
    %v169 = vmul.f32 %v73, 20.0
    %v170 = vmul.f32 %v74, 20.0
    %v171 = vmul.f32 %v75, 20.0
    %v172 = vmul.f32 %v76, 20.0
    %v173 = vld [vmem:[#allocation5] sm:$0xff]
    %v174 = vld [vmem:[#allocation5 + $0x8] sm:$0xff]
    %v175 = vld [vmem:[#allocation5 + $0x10] sm:$0xff]
    %v176 = vld [vmem:[#allocation5 + $0x18] sm:$0xff]
    %v177 = vld [vmem:[#allocation5 + $0x20] sm:$0xff]
    %v178 = vld [vmem:[#allocation5 + $0x28] sm:$0xff]
    %v179 = vld [vmem:[#allocation5 + $0x30] sm:$0xff]
    %v180 = vld [vmem:[#allocation5 + $0x38] sm:$0xff]
    %v181 = vld [vmem:[#allocation5 + $0x40] sm:$0xff]
    %v182 = vld [vmem:[#allocation5 + $0x48] sm:$0xff]
    %v183 = vld [vmem:[#allocation5 + $0x50] sm:$0xff]
    %v184 = vld [vmem:[#allocation5 + $0x58] sm:$0xff]
    %v185 = vld [vmem:[#allocation5 + $0x60] sm:$0xff]
    %v186 = vld [vmem:[#allocation5 + $0x68] sm:$0xff]
    %v187 = vld [vmem:[#allocation5 + $0x70] sm:$0xff]
    %v188 = vld [vmem:[#allocation5 + $0x78] sm:$0xff]
    %v189 = vld [vmem:[#allocation5 + $0x80] sm:$0xff]
    %v190 = vld [vmem:[#allocation5 + $0x88] sm:$0xff]
    %v191 = vld [vmem:[#allocation5 + $0x90] sm:$0xff]
    %v192 = vld [vmem:[#allocation5 + $0x98] sm:$0xff]
    %v193 = vld [vmem:[#allocation5 + $0xa0] sm:$0xff]
    %v194 = vld [vmem:[#allocation5 + $0xa8] sm:$0xff]
    %v195 = vld [vmem:[#allocation5 + $0xb0] sm:$0xff]
    %v196 = vld [vmem:[#allocation5 + $0xb8] sm:$0xff]
    %v197 = vld [vmem:[#allocation5 + $0xc0] sm:$0xff]
    %v198 = vld [vmem:[#allocation5 + $0xc8] sm:$0xff]
    %v199 = vld [vmem:[#allocation5 + $0xd0] sm:$0xff]
    %v200 = vld [vmem:[#allocation5 + $0xd8] sm:$0xff]
    %v201 = vld [vmem:[#allocation5 + $0xe0] sm:$0xff]
    %v202 = vld [vmem:[#allocation5 + $0xe8] sm:$0xff]
    %v203 = vld [vmem:[#allocation5 + $0xf0] sm:$0xff]
    %v204 = vld [vmem:[#allocation5 + $0xf8] sm:$0xff]
    %205 = vmatpush.msra.mxu0 %v203
    %206 = vmatpush.msra.mxu0 %v201
    %207 = vmatpush.msra.mxu0 %v199
    %208 = vmatpush.msra.mxu0 %v197
    %209 = vmatpush.msra.mxu0 %v195
    %210 = vmatpush.msra.mxu0 %v193
    %211 = vmatpush.msra.mxu0 %v191
    %212 = vmatpush.msra.mxu0 %v189
    %213 = vmatpush.msra.mxu0 %v187
    %214 = vmatpush.msra.mxu0 %v185
    %215 = vmatpush.msra.mxu0 %v183
    %216 = vmatpush.msra.mxu0 %v181
    %217 = vmatpush.msra.mxu0 %v179
    %218 = vmatpush.msra.mxu0 %v177
    %219 = vmatpush.msra.mxu0 %v175
    %220 = vmatpush.msra.mxu0 %v173
    %221 = vmatmul.f32.gmra.mxu0 %v141
    %v222 = vpop.f32.mrf.mxu0
    %v223 = vadd.f32 0.0, %v222
    %224 = vmatmul.f32.gmra.mxu0 %v142
    %v225 = vpop.f32.mrf.mxu0
    %v226 = vadd.f32 0.0, %v225
    %227 = vmatmul.f32.gmra.mxu0 %v143
    %v228 = vpop.f32.mrf.mxu0
    %v229 = vadd.f32 0.0, %v228
    %230 = vmatmul.f32.gmra.mxu0 %v144
    %v231 = vpop.f32.mrf.mxu0
    %v232 = vadd.f32 0.0, %v231
    %233 = vmatmul.f32.gmra.mxu0 %v145
    %v234 = vpop.f32.mrf.mxu0
    %v235 = vadd.f32 0.0, %v234
    %236 = vmatmul.f32.gmra.mxu0 %v146
    %v237 = vpop.f32.mrf.mxu0
    %v238 = vadd.f32 0.0, %v237
    %239 = vmatmul.f32.gmra.mxu0 %v147
    %v240 = vpop.f32.mrf.mxu0
    %v241 = vadd.f32 0.0, %v240
    %242 = vmatmul.f32.gmra.mxu0 %v148
    %v243 = vpop.f32.mrf.mxu0
    %v244 = vadd.f32 0.0, %v243
    %245 = vmatmul.f32.gmra.mxu0 %v149
    %v246 = vpop.f32.mrf.mxu0
    %v247 = vadd.f32 0.0, %v246
    %248 = vmatmul.f32.gmra.mxu0 %v150
    %v249 = vpop.f32.mrf.mxu0
    %v250 = vadd.f32 0.0, %v249
    %251 = vmatmul.f32.gmra.mxu0 %v151
    %v252 = vpop.f32.mrf.mxu0
    %v253 = vadd.f32 0.0, %v252
    %254 = vmatmul.f32.gmra.mxu0 %v152
    %v255 = vpop.f32.mrf.mxu0
    %v256 = vadd.f32 0.0, %v255
    %257 = vmatmul.f32.gmra.mxu0 %v153
    %v258 = vpop.f32.mrf.mxu0
    %v259 = vadd.f32 0.0, %v258
    %260 = vmatmul.f32.gmra.mxu0 %v154
    %v261 = vpop.f32.mrf.mxu0
    %v262 = vadd.f32 0.0, %v261
    %263 = vmatmul.f32.gmra.mxu0 %v155
    %v264 = vpop.f32.mrf.mxu0
    %v265 = vadd.f32 0.0, %v264
    %266 = vmatmul.f32.gmra.mxu0 %v156
    %v267 = vpop.f32.mrf.mxu0
    %v268 = vadd.f32 0.0, %v267
    %269 = vmatmul.f32.gmra.mxu0 %v157
    %v270 = vpop.f32.mrf.mxu0
    %v271 = vadd.f32 0.0, %v270
    %272 = vmatmul.f32.gmra.mxu0 %v158
    %v273 = vpop.f32.mrf.mxu0
    %v274 = vadd.f32 0.0, %v273
    %275 = vmatmul.f32.gmra.mxu0 %v159
    %v276 = vpop.f32.mrf.mxu0
    %v277 = vadd.f32 0.0, %v276
    %278 = vmatmul.f32.gmra.mxu0 %v160
    %v279 = vpop.f32.mrf.mxu0
    %v280 = vadd.f32 0.0, %v279
    %281 = vmatmul.f32.gmra.mxu0 %v161
    %v282 = vpop.f32.mrf.mxu0
    %v283 = vadd.f32 0.0, %v282
    %284 = vmatmul.f32.gmra.mxu0 %v162
    %v285 = vpop.f32.mrf.mxu0
    %v286 = vadd.f32 0.0, %v285
    %287 = vmatmul.f32.gmra.mxu0 %v163
    %v288 = vpop.f32.mrf.mxu0
    %v289 = vadd.f32 0.0, %v288
    %290 = vmatmul.f32.gmra.mxu0 %v164
    %v291 = vpop.f32.mrf.mxu0
    %v292 = vadd.f32 0.0, %v291
    %293 = vmatmul.f32.gmra.mxu0 %v165
    %v294 = vpop.f32.mrf.mxu0
    %v295 = vadd.f32 0.0, %v294
    %296 = vmatmul.f32.gmra.mxu0 %v166
    %v297 = vpop.f32.mrf.mxu0
    %v298 = vadd.f32 0.0, %v297
    %299 = vmatmul.f32.gmra.mxu0 %v167
    %v300 = vpop.f32.mrf.mxu0
    %v301 = vadd.f32 0.0, %v300
    %302 = vmatmul.f32.gmra.mxu0 %v168
    %v303 = vpop.f32.mrf.mxu0
    %v304 = vadd.f32 0.0, %v303
    %305 = vmatmul.f32.gmra.mxu0 %v169
    %v306 = vpop.f32.mrf.mxu0
    %v307 = vadd.f32 0.0, %v306
    %308 = vmatmul.f32.gmra.mxu0 %v170
    %v309 = vpop.f32.mrf.mxu0
    %v310 = vadd.f32 0.0, %v309
    %311 = vmatmul.f32.gmra.mxu0 %v171
    %v312 = vpop.f32.mrf.mxu0
    %v313 = vadd.f32 0.0, %v312
    %314 = vmatmul.f32.gmra.mxu0 %v172
    %v315 = vpop.f32.mrf.mxu0
    %v316 = vadd.f32 0.0, %v315
    %317 = vdwg.mxu0
    %318 = vmatpush.msra.mxu0 %v204
    %319 = vmatpush.msra.mxu0 %v202
    %320 = vmatpush.msra.mxu0 %v200
    %321 = vmatpush.msra.mxu0 %v198
    %322 = vmatpush.msra.mxu0 %v196
    %323 = vmatpush.msra.mxu0 %v194
    %324 = vmatpush.msra.mxu0 %v192
    %325 = vmatpush.msra.mxu0 %v190
    %326 = vmatpush.msra.mxu0 %v188
    %327 = vmatpush.msra.mxu0 %v186
    %328 = vmatpush.msra.mxu0 %v184
    %329 = vmatpush.msra.mxu0 %v182
    %330 = vmatpush.msra.mxu0 %v180
    %331 = vmatpush.msra.mxu0 %v178
    %332 = vmatpush.msra.mxu0 %v176
    %333 = vmatpush.msra.mxu0 %v174
    %334 = vmatmul.f32.gmra.mxu0 %v141
    %v335 = vpop.f32.mrf.mxu0
    %v336 = vadd.f32 0.0, %v335
    %337 = vmatmul.f32.gmra.mxu0 %v142
    %v338 = vpop.f32.mrf.mxu0
    %v339 = vadd.f32 0.0, %v338
    %340 = vmatmul.f32.gmra.mxu0 %v143
    %v341 = vpop.f32.mrf.mxu0
    %v342 = vadd.f32 0.0, %v341
    %343 = vmatmul.f32.gmra.mxu0 %v144
    %v344 = vpop.f32.mrf.mxu0
    %v345 = vadd.f32 0.0, %v344
    %346 = vmatmul.f32.gmra.mxu0 %v145
    %v347 = vpop.f32.mrf.mxu0
    %v348 = vadd.f32 0.0, %v347
    %349 = vmatmul.f32.gmra.mxu0 %v146
    %v350 = vpop.f32.mrf.mxu0
    %v351 = vadd.f32 0.0, %v350
    %352 = vmatmul.f32.gmra.mxu0 %v147
    %v353 = vpop.f32.mrf.mxu0
    %v354 = vadd.f32 0.0, %v353
    %355 = vmatmul.f32.gmra.mxu0 %v148
    %v356 = vpop.f32.mrf.mxu0
    %v357 = vadd.f32 0.0, %v356
    %358 = vmatmul.f32.gmra.mxu0 %v149
    %v359 = vpop.f32.mrf.mxu0
    %v360 = vadd.f32 0.0, %v359
    %361 = vmatmul.f32.gmra.mxu0 %v150
    %v362 = vpop.f32.mrf.mxu0
    %v363 = vadd.f32 0.0, %v362
    %364 = vmatmul.f32.gmra.mxu0 %v151
    %v365 = vpop.f32.mrf.mxu0
    %v366 = vadd.f32 0.0, %v365
    %367 = vmatmul.f32.gmra.mxu0 %v152
    %v368 = vpop.f32.mrf.mxu0
    %v369 = vadd.f32 0.0, %v368
    %370 = vmatmul.f32.gmra.mxu0 %v153
    %v371 = vpop.f32.mrf.mxu0
    %v372 = vadd.f32 0.0, %v371
    %373 = vmatmul.f32.gmra.mxu0 %v154
    %v374 = vpop.f32.mrf.mxu0
    %v375 = vadd.f32 0.0, %v374
    %376 = vmatmul.f32.gmra.mxu0 %v155
    %v377 = vpop.f32.mrf.mxu0
    %v378 = vadd.f32 0.0, %v377
    %379 = vmatmul.f32.gmra.mxu0 %v156
    %v380 = vpop.f32.mrf.mxu0
    %v381 = vadd.f32 0.0, %v380
    %382 = vmatmul.f32.gmra.mxu0 %v157
    %v383 = vpop.f32.mrf.mxu0
    %v384 = vadd.f32 0.0, %v383
    %385 = vmatmul.f32.gmra.mxu0 %v158
    %v386 = vpop.f32.mrf.mxu0
    %v387 = vadd.f32 0.0, %v386
    %388 = vmatmul.f32.gmra.mxu0 %v159
    %v389 = vpop.f32.mrf.mxu0
    %v390 = vadd.f32 0.0, %v389
    %391 = vmatmul.f32.gmra.mxu0 %v160
    %v392 = vpop.f32.mrf.mxu0
    %v393 = vadd.f32 0.0, %v392
    %394 = vmatmul.f32.gmra.mxu0 %v161
    %v395 = vpop.f32.mrf.mxu0
    %v396 = vadd.f32 0.0, %v395
    %397 = vmatmul.f32.gmra.mxu0 %v162
    %v398 = vpop.f32.mrf.mxu0
    %v399 = vadd.f32 0.0, %v398
    %400 = vmatmul.f32.gmra.mxu0 %v163
    %v401 = vpop.f32.mrf.mxu0
    %v402 = vadd.f32 0.0, %v401
    %403 = vmatmul.f32.gmra.mxu0 %v164
    %v404 = vpop.f32.mrf.mxu0
    %v405 = vadd.f32 0.0, %v404
    %406 = vmatmul.f32.gmra.mxu0 %v165
    %v407 = vpop.f32.mrf.mxu0
    %v408 = vadd.f32 0.0, %v407
    %409 = vmatmul.f32.gmra.mxu0 %v166
    %v410 = vpop.f32.mrf.mxu0
    %v411 = vadd.f32 0.0, %v410
    %412 = vmatmul.f32.gmra.mxu0 %v167
    %v413 = vpop.f32.mrf.mxu0
    %v414 = vadd.f32 0.0, %v413
    %415 = vmatmul.f32.gmra.mxu0 %v168
    %v416 = vpop.f32.mrf.mxu0
    %v417 = vadd.f32 0.0, %v416
    %418 = vmatmul.f32.gmra.mxu0 %v169
    %v419 = vpop.f32.mrf.mxu0
    %v420 = vadd.f32 0.0, %v419
    %421 = vmatmul.f32.gmra.mxu0 %v170
    %v422 = vpop.f32.mrf.mxu0
    %v423 = vadd.f32 0.0, %v422
    %424 = vmatmul.f32.gmra.mxu0 %v171
    %v425 = vpop.f32.mrf.mxu0
    %v426 = vadd.f32 0.0, %v425
    %427 = vmatmul.f32.gmra.mxu0 %v172
    %v428 = vpop.f32.mrf.mxu0
    %v429 = vadd.f32 0.0, %v428
    %430 = vdwg.mxu0
    %v431 = vlaneseq
    %v432 = vand.u32 %v431, 127
    %v433 = vlaneseq
    %v434 = vshrl.u32 %v433, 7
    %v435 = vadd.s32 %v434, 8
    %v436 = vadd.s32 %v434, 16
    %v437 = vadd.s32 %v434, 24
    %v438 = vadd.s32 %v434, 32
    %v439 = vadd.s32 %v434, 40
    %v440 = vadd.s32 %v434, 48
    %v441 = vadd.s32 %v434, 56
    %v442 = vadd.s32 %v434, 64
    %v443 = vadd.s32 %v434, 72
    %v444 = vadd.s32 %v434, 80
    %v445 = vadd.s32 %v434, 88
    %v446 = vadd.s32 %v434, 96
    %v447 = vadd.s32 %v434, 104
    %v448 = vadd.s32 %v434, 112
    %v449 = vadd.s32 %v434, 120
    %v450 = vstv %s44
    %v451 = vadd.s32 %v450, %v434
    %v452 = vadd.s32 %v450, %v435
    %v453 = vadd.s32 %v450, %v436
    %v454 = vadd.s32 %v450, %v437
    %v455 = vadd.s32 %v450, %v438
    %v456 = vadd.s32 %v450, %v439
    %v457 = vadd.s32 %v450, %v440
    %v458 = vadd.s32 %v450, %v441
    %v459 = vadd.s32 %v450, %v442
    %v460 = vadd.s32 %v450, %v443
    %v461 = vadd.s32 %v450, %v444
    %v462 = vadd.s32 %v450, %v445
    %v463 = vadd.s32 %v450, %v446
    %v464 = vadd.s32 %v450, %v447
    %v465 = vadd.s32 %v450, %v448
    %v466 = vadd.s32 %v450, %v449
    %vm467 = vcmp.ne.s32.totalorder %v432, %v451
    %vm468 = vcmp.ne.s32.totalorder %v432, %v452
    %vm469 = vcmp.ne.s32.totalorder %v432, %v453
    %vm470 = vcmp.ne.s32.totalorder %v432, %v454
    %vm471 = vcmp.ne.s32.totalorder %v432, %v455
    %vm472 = vcmp.ne.s32.totalorder %v432, %v456
    %vm473 = vcmp.ne.s32.totalorder %v432, %v457
    %vm474 = vcmp.ne.s32.totalorder %v432, %v458
    %vm475 = vcmp.ne.s32.totalorder %v432, %v459
    %vm476 = vcmp.ne.s32.totalorder %v432, %v460
    %vm477 = vcmp.ne.s32.totalorder %v432, %v461
    %vm478 = vcmp.ne.s32.totalorder %v432, %v462
    %vm479 = vcmp.ne.s32.totalorder %v432, %v463
    %vm480 = vcmp.ne.s32.totalorder %v432, %v464
    %vm481 = vcmp.ne.s32.totalorder %v432, %v465
    %vm482 = vcmp.ne.s32.totalorder %v432, %v466
    %vm483 = vcmp.lt.s32.totalorder %v432, 8
    %v484 = vsel %vm483, 1, 0
    %vm485 = vcmp.eq.s32.totalorder %v484, 1
    %vm486 = vmand %vm485, %vm467
    %vm487 = vmand %vm485, %vm468
    %vm488 = vmand %vm485, %vm469
    %vm489 = vmand %vm485, %vm470
    %vm490 = vmand %vm485, %vm471
    %vm491 = vmand %vm485, %vm472
    %vm492 = vmand %vm485, %vm473
    %vm493 = vmand %vm485, %vm474
    %vm494 = vmand %vm485, %vm475
    %vm495 = vmand %vm485, %vm476
    %vm496 = vmand %vm485, %vm477
    %vm497 = vmand %vm485, %vm478
    %vm498 = vmand %vm485, %vm479
    %vm499 = vmand %vm485, %vm480
    %vm500 = vmand %vm485, %vm481
    %vm501 = vmand %vm485, %vm482
    %v502 = vsel %vm485, %v336, -1e+09
    %v503 = vsel %vm485, %v339, -1e+09
    %v504 = vsel %vm485, %v342, -1e+09
    %v505 = vsel %vm485, %v345, -1e+09
    %v506 = vsel %vm485, %v348, -1e+09
    %v507 = vsel %vm485, %v351, -1e+09
    %v508 = vsel %vm485, %v354, -1e+09
    %v509 = vsel %vm485, %v357, -1e+09
    %v510 = vsel %vm485, %v360, -1e+09
    %v511 = vsel %vm485, %v363, -1e+09
    %v512 = vsel %vm485, %v366, -1e+09
    %v513 = vsel %vm485, %v369, -1e+09
    %v514 = vsel %vm485, %v372, -1e+09
    %v515 = vsel %vm485, %v375, -1e+09
    %v516 = vsel %vm485, %v378, -1e+09
    %v517 = vsel %vm485, %v381, -1e+09
    %v518 = vsel %vm485, %v271, -1e+09
    %v519 = vsel %vm485, %v274, -1e+09
    %v520 = vsel %vm485, %v277, -1e+09
    %v521 = vsel %vm485, %v280, -1e+09
    %v522 = vsel %vm485, %v283, -1e+09
    %v523 = vsel %vm485, %v286, -1e+09
    %v524 = vsel %vm485, %v289, -1e+09
    %v525 = vsel %vm485, %v292, -1e+09
    %v526 = vsel %vm485, %v295, -1e+09
    %v527 = vsel %vm485, %v298, -1e+09
    %v528 = vsel %vm485, %v301, -1e+09
    %v529 = vsel %vm485, %v304, -1e+09
    %v530 = vsel %vm485, %v307, -1e+09
    %v531 = vsel %vm485, %v310, -1e+09
    %v532 = vsel %vm485, %v313, -1e+09
    %v533 = vsel %vm485, %v316, -1e+09
    %v534 = vsel %vm486, %v223, -1e+09
    %v535 = vsel %vm487, %v226, -1e+09
    %v536 = vsel %vm488, %v229, -1e+09
    %v537 = vsel %vm489, %v232, -1e+09
    %v538 = vsel %vm490, %v235, -1e+09
    %v539 = vsel %vm491, %v238, -1e+09
    %v540 = vsel %vm492, %v241, -1e+09
    %v541 = vsel %vm493, %v244, -1e+09
    %v542 = vsel %vm494, %v247, -1e+09
    %v543 = vsel %vm495, %v250, -1e+09
    %v544 = vsel %vm496, %v253, -1e+09
    %v545 = vsel %vm497, %v256, -1e+09
    %v546 = vsel %vm498, %v259, -1e+09
    %v547 = vsel %vm499, %v262, -1e+09
    %v548 = vsel %vm500, %v265, -1e+09
    %v549 = vsel %vm501, %v268, -1e+09
    %v550 = vsel %vm486, %v384, -1e+09
    %v551 = vsel %vm487, %v387, -1e+09
    %v552 = vsel %vm488, %v390, -1e+09
    %v553 = vsel %vm489, %v393, -1e+09
    %v554 = vsel %vm490, %v396, -1e+09
    %v555 = vsel %vm491, %v399, -1e+09
    %v556 = vsel %vm492, %v402, -1e+09
    %v557 = vsel %vm493, %v405, -1e+09
    %v558 = vsel %vm494, %v408, -1e+09
    %v559 = vsel %vm495, %v411, -1e+09
    %v560 = vsel %vm496, %v414, -1e+09
    %v561 = vsel %vm497, %v417, -1e+09
    %v562 = vsel %vm498, %v420, -1e+09
    %v563 = vsel %vm499, %v423, -1e+09
    %v564 = vsel %vm500, %v426, -1e+09
    %v565 = vsel %vm501, %v429, -1e+09
    %566 = vmax.xlane.f32.xlu0 %v502
    %v567 = vpop.xlane.xlu0 %566
    %568 = vmax.xlane.f32.xlu0 %v503
    %v569 = vpop.xlane.xlu0 %568
    %570 = vmax.xlane.f32.xlu0 %v504
    %v571 = vpop.xlane.xlu0 %570
    %572 = vmax.xlane.f32.xlu0 %v505
    %v573 = vpop.xlane.xlu0 %572
    %574 = vmax.xlane.f32.xlu0 %v506
    %v575 = vpop.xlane.xlu0 %574
    %576 = vmax.xlane.f32.xlu0 %v507
    %v577 = vpop.xlane.xlu0 %576
    %578 = vmax.xlane.f32.xlu0 %v508
    %v579 = vpop.xlane.xlu0 %578
    %580 = vmax.xlane.f32.xlu0 %v509
    %v581 = vpop.xlane.xlu0 %580
    %582 = vmax.xlane.f32.xlu0 %v510
    %v583 = vpop.xlane.xlu0 %582
    %584 = vmax.xlane.f32.xlu0 %v511
    %v585 = vpop.xlane.xlu0 %584
    %586 = vmax.xlane.f32.xlu0 %v512
    %v587 = vpop.xlane.xlu0 %586
    %588 = vmax.xlane.f32.xlu0 %v513
    %v589 = vpop.xlane.xlu0 %588
    %590 = vmax.xlane.f32.xlu0 %v514
    %v591 = vpop.xlane.xlu0 %590
    %592 = vmax.xlane.f32.xlu0 %v515
    %v593 = vpop.xlane.xlu0 %592
    %594 = vmax.xlane.f32.xlu0 %v516
    %v595 = vpop.xlane.xlu0 %594
    %596 = vmax.xlane.f32.xlu0 %v517
    %v597 = vpop.xlane.xlu0 %596
    %598 = vmax.xlane.f32.xlu0 %v534
    %v599 = vpop.xlane.xlu0 %598
    %600 = vmax.xlane.f32.xlu0 %v535
    %v601 = vpop.xlane.xlu0 %600
    %602 = vmax.xlane.f32.xlu0 %v536
    %v603 = vpop.xlane.xlu0 %602
    %604 = vmax.xlane.f32.xlu0 %v537
    %v605 = vpop.xlane.xlu0 %604
    %606 = vmax.xlane.f32.xlu0 %v538
    %v607 = vpop.xlane.xlu0 %606
    %608 = vmax.xlane.f32.xlu0 %v539
    %v609 = vpop.xlane.xlu0 %608
    %610 = vmax.xlane.f32.xlu0 %v540
    %v611 = vpop.xlane.xlu0 %610
    %612 = vmax.xlane.f32.xlu0 %v541
    %v613 = vpop.xlane.xlu0 %612
    %614 = vmax.xlane.f32.xlu0 %v542
    %v615 = vpop.xlane.xlu0 %614
    %616 = vmax.xlane.f32.xlu0 %v543
    %v617 = vpop.xlane.xlu0 %616
    %618 = vmax.xlane.f32.xlu0 %v544
    %v619 = vpop.xlane.xlu0 %618
    %620 = vmax.xlane.f32.xlu0 %v545
    %v621 = vpop.xlane.xlu0 %620
    %622 = vmax.xlane.f32.xlu0 %v546
    %v623 = vpop.xlane.xlu0 %622
    %624 = vmax.xlane.f32.xlu0 %v547
    %v625 = vpop.xlane.xlu0 %624
    %626 = vmax.xlane.f32.xlu0 %v548
    %v627 = vpop.xlane.xlu0 %626
    %628 = vmax.xlane.f32.xlu0 %v549
    %v629 = vpop.xlane.xlu0 %628
    %v630 = vmax.f32 %v567, %v599
    %v631 = vmax.f32 %v569, %v601
    %v632 = vmax.f32 %v571, %v603
    %v633 = vmax.f32 %v573, %v605
    %v634 = vmax.f32 %v575, %v607
    %v635 = vmax.f32 %v577, %v609
    %v636 = vmax.f32 %v579, %v611
    %v637 = vmax.f32 %v581, %v613
    %v638 = vmax.f32 %v583, %v615
    %v639 = vmax.f32 %v585, %v617
    %v640 = vmax.f32 %v587, %v619
    %v641 = vmax.f32 %v589, %v621
    %v642 = vmax.f32 %v591, %v623
    %v643 = vmax.f32 %v593, %v625
    %v644 = vmax.f32 %v595, %v627
    %v645 = vmax.f32 %v597, %v629
    %v646 = vsub.f32 %v502, %v630
    %v647 = vsub.f32 %v503, %v631
    %v648 = vsub.f32 %v504, %v632
    %v649 = vsub.f32 %v505, %v633
    %v650 = vsub.f32 %v506, %v634
    %v651 = vsub.f32 %v507, %v635
    %v652 = vsub.f32 %v508, %v636
    %v653 = vsub.f32 %v509, %v637
    %v654 = vsub.f32 %v510, %v638
    %v655 = vsub.f32 %v511, %v639
    %v656 = vsub.f32 %v512, %v640
    %v657 = vsub.f32 %v513, %v641
    %v658 = vsub.f32 %v514, %v642
    %v659 = vsub.f32 %v515, %v643
    %v660 = vsub.f32 %v516, %v644
    %v661 = vsub.f32 %v517, %v645
    %v662 = vmul.f32 %v646, 1.442695
    %v663 = vpow.pop %v662
    %v664 = vmul.f32 %v647, 1.442695
    %v665 = vpow.pop %v664
    %v666 = vmul.f32 %v648, 1.442695
    %v667 = vpow.pop %v666
    %v668 = vmul.f32 %v649, 1.442695
    %v669 = vpow.pop %v668
    %v670 = vmul.f32 %v650, 1.442695
    %v671 = vpow.pop %v670
    %v672 = vmul.f32 %v651, 1.442695
    %v673 = vpow.pop %v672
    %v674 = vmul.f32 %v652, 1.442695
    %v675 = vpow.pop %v674
    %v676 = vmul.f32 %v653, 1.442695
    %v677 = vpow.pop %v676
    %v678 = vmul.f32 %v654, 1.442695
    %v679 = vpow.pop %v678
    %v680 = vmul.f32 %v655, 1.442695
    %v681 = vpow.pop %v680
    %v682 = vmul.f32 %v656, 1.442695
    %v683 = vpow.pop %v682
    %v684 = vmul.f32 %v657, 1.442695
    %v685 = vpow.pop %v684
    %v686 = vmul.f32 %v658, 1.442695
    %v687 = vpow.pop %v686
    %v688 = vmul.f32 %v659, 1.442695
    %v689 = vpow.pop %v688
    %v690 = vmul.f32 %v660, 1.442695
    %v691 = vpow.pop %v690
    %v692 = vmul.f32 %v661, 1.442695
    %v693 = vpow.pop %v692
    %694 = vadd.xlane.f32.xlu0 %v663
    %v695 = vpop.xlane.xlu0 %694
    %696 = vadd.xlane.f32.xlu0 %v665
    %v697 = vpop.xlane.xlu0 %696
    %698 = vadd.xlane.f32.xlu0 %v667
    %v699 = vpop.xlane.xlu0 %698
    %700 = vadd.xlane.f32.xlu0 %v669
    %v701 = vpop.xlane.xlu0 %700
    %702 = vadd.xlane.f32.xlu0 %v671
    %v703 = vpop.xlane.xlu0 %702
    %704 = vadd.xlane.f32.xlu0 %v673
    %v705 = vpop.xlane.xlu0 %704
    %706 = vadd.xlane.f32.xlu0 %v675
    %v707 = vpop.xlane.xlu0 %706
    %708 = vadd.xlane.f32.xlu0 %v677
    %v709 = vpop.xlane.xlu0 %708
    %710 = vadd.xlane.f32.xlu0 %v679
    %v711 = vpop.xlane.xlu0 %710
    %712 = vadd.xlane.f32.xlu0 %v681
    %v713 = vpop.xlane.xlu0 %712
    %714 = vadd.xlane.f32.xlu0 %v683
    %v715 = vpop.xlane.xlu0 %714
    %716 = vadd.xlane.f32.xlu0 %v685
    %v717 = vpop.xlane.xlu0 %716
    %718 = vadd.xlane.f32.xlu0 %v687
    %v719 = vpop.xlane.xlu0 %718
    %720 = vadd.xlane.f32.xlu0 %v689
    %v721 = vpop.xlane.xlu0 %720
    %722 = vadd.xlane.f32.xlu0 %v691
    %v723 = vpop.xlane.xlu0 %722
    %724 = vadd.xlane.f32.xlu0 %v693
    %v725 = vpop.xlane.xlu0 %724
    %v726 = vsub.f32 %v534, %v630
    %v727 = vsub.f32 %v535, %v631
    %v728 = vsub.f32 %v536, %v632
    %v729 = vsub.f32 %v537, %v633
    %v730 = vsub.f32 %v538, %v634
    %v731 = vsub.f32 %v539, %v635
    %v732 = vsub.f32 %v540, %v636
    %v733 = vsub.f32 %v541, %v637
    %v734 = vsub.f32 %v542, %v638
    %v735 = vsub.f32 %v543, %v639
    %v736 = vsub.f32 %v544, %v640
    %v737 = vsub.f32 %v545, %v641
    %v738 = vsub.f32 %v546, %v642
    %v739 = vsub.f32 %v547, %v643
    %v740 = vsub.f32 %v548, %v644
    %v741 = vsub.f32 %v549, %v645
    %v742 = vmul.f32 %v726, 1.442695
    %v743 = vpow.pop %v742
    %v744 = vmul.f32 %v727, 1.442695
    %v745 = vpow.pop %v744
    %v746 = vmul.f32 %v728, 1.442695
    %v747 = vpow.pop %v746
    %v748 = vmul.f32 %v729, 1.442695
    %v749 = vpow.pop %v748
    %v750 = vmul.f32 %v730, 1.442695
    %v751 = vpow.pop %v750
    %v752 = vmul.f32 %v731, 1.442695
    %v753 = vpow.pop %v752
    %v754 = vmul.f32 %v732, 1.442695
    %v755 = vpow.pop %v754
    %v756 = vmul.f32 %v733, 1.442695
    %v757 = vpow.pop %v756
    %v758 = vmul.f32 %v734, 1.442695
    %v759 = vpow.pop %v758
    %v760 = vmul.f32 %v735, 1.442695
    %v761 = vpow.pop %v760
    %v762 = vmul.f32 %v736, 1.442695
    %v763 = vpow.pop %v762
    %v764 = vmul.f32 %v737, 1.442695
    %v765 = vpow.pop %v764
    %v766 = vmul.f32 %v738, 1.442695
    %v767 = vpow.pop %v766
    %v768 = vmul.f32 %v739, 1.442695
    %v769 = vpow.pop %v768
    %v770 = vmul.f32 %v740, 1.442695
    %v771 = vpow.pop %v770
    %v772 = vmul.f32 %v741, 1.442695
    %v773 = vpow.pop %v772
    %774 = vadd.xlane.f32.xlu0 %v743
    %v775 = vpop.xlane.xlu0 %774
    %776 = vadd.xlane.f32.xlu0 %v745
    %v777 = vpop.xlane.xlu0 %776
    %778 = vadd.xlane.f32.xlu0 %v747
    %v779 = vpop.xlane.xlu0 %778
    %780 = vadd.xlane.f32.xlu0 %v749
    %v781 = vpop.xlane.xlu0 %780
    %782 = vadd.xlane.f32.xlu0 %v751
    %v783 = vpop.xlane.xlu0 %782
    %784 = vadd.xlane.f32.xlu0 %v753
    %v785 = vpop.xlane.xlu0 %784
    %786 = vadd.xlane.f32.xlu0 %v755
    %v787 = vpop.xlane.xlu0 %786
    %788 = vadd.xlane.f32.xlu0 %v757
    %v789 = vpop.xlane.xlu0 %788
    %790 = vadd.xlane.f32.xlu0 %v759
    %v791 = vpop.xlane.xlu0 %790
    %792 = vadd.xlane.f32.xlu0 %v761
    %v793 = vpop.xlane.xlu0 %792
    %794 = vadd.xlane.f32.xlu0 %v763
    %v795 = vpop.xlane.xlu0 %794
    %796 = vadd.xlane.f32.xlu0 %v765
    %v797 = vpop.xlane.xlu0 %796
    %798 = vadd.xlane.f32.xlu0 %v767
    %v799 = vpop.xlane.xlu0 %798
    %800 = vadd.xlane.f32.xlu0 %v769
    %v801 = vpop.xlane.xlu0 %800
    %802 = vadd.xlane.f32.xlu0 %v771
    %v803 = vpop.xlane.xlu0 %802
    %804 = vadd.xlane.f32.xlu0 %v773
    %v805 = vpop.xlane.xlu0 %804
    %v806 = vadd.f32 %v695, %v775
    %v807 = vadd.f32 %v697, %v777
    %v808 = vadd.f32 %v699, %v779
    %v809 = vadd.f32 %v701, %v781
    %v810 = vadd.f32 %v703, %v783
    %v811 = vadd.f32 %v705, %v785
    %v812 = vadd.f32 %v707, %v787
    %v813 = vadd.f32 %v709, %v789
    %v814 = vadd.f32 %v711, %v791
    %v815 = vadd.f32 %v713, %v793
    %v816 = vadd.f32 %v715, %v795
    %v817 = vadd.f32 %v717, %v797
    %v818 = vadd.f32 %v719, %v799
    %v819 = vadd.f32 %v721, %v801
    %v820 = vadd.f32 %v723, %v803
    %v821 = vadd.f32 %v725, %v805
    %v822 = vlog2.pop %v806
    %v823 = vmul.f32 %v822, 0.6931472
    %v824 = vlog2.pop %v807
    %v825 = vmul.f32 %v824, 0.6931472
    %v826 = vlog2.pop %v808
    %v827 = vmul.f32 %v826, 0.6931472
    %v828 = vlog2.pop %v809
    %v829 = vmul.f32 %v828, 0.6931472
    %v830 = vlog2.pop %v810
    %v831 = vmul.f32 %v830, 0.6931472
    %v832 = vlog2.pop %v811
    %v833 = vmul.f32 %v832, 0.6931472
    %v834 = vlog2.pop %v812
    %v835 = vmul.f32 %v834, 0.6931472
    %v836 = vlog2.pop %v813
    %v837 = vmul.f32 %v836, 0.6931472
    %v838 = vlog2.pop %v814
    %v839 = vmul.f32 %v838, 0.6931472
    %v840 = vlog2.pop %v815
    %v841 = vmul.f32 %v840, 0.6931472
    %v842 = vlog2.pop %v816
    %v843 = vmul.f32 %v842, 0.6931472
    %v844 = vlog2.pop %v817
    %v845 = vmul.f32 %v844, 0.6931472
    %v846 = vlog2.pop %v818
    %v847 = vmul.f32 %v846, 0.6931472
    %v848 = vlog2.pop %v819
    %v849 = vmul.f32 %v848, 0.6931472
    %v850 = vlog2.pop %v820
    %v851 = vmul.f32 %v850, 0.6931472
    %v852 = vlog2.pop %v821
    %v853 = vmul.f32 %v852, 0.6931472
    %v854 = vadd.f32 %v630, %v823
    %v855 = vadd.f32 %v631, %v825
    %v856 = vadd.f32 %v632, %v827
    %v857 = vadd.f32 %v633, %v829
    %v858 = vadd.f32 %v634, %v831
    %v859 = vadd.f32 %v635, %v833
    %v860 = vadd.f32 %v636, %v835
    %v861 = vadd.f32 %v637, %v837
    %v862 = vadd.f32 %v638, %v839
    %v863 = vadd.f32 %v639, %v841
    %v864 = vadd.f32 %v640, %v843
    %v865 = vadd.f32 %v641, %v845
    %v866 = vadd.f32 %v642, %v847
    %v867 = vadd.f32 %v643, %v849
    %v868 = vadd.f32 %v644, %v851
    %v869 = vadd.f32 %v645, %v853
    %870 = vmax.xlane.f32.xlu0 %v518
    %v871 = vpop.xlane.xlu0 %870
    %872 = vmax.xlane.f32.xlu0 %v519
    %v873 = vpop.xlane.xlu0 %872
    %874 = vmax.xlane.f32.xlu0 %v520
    %v875 = vpop.xlane.xlu0 %874
    %876 = vmax.xlane.f32.xlu0 %v521
    %v877 = vpop.xlane.xlu0 %876
    %878 = vmax.xlane.f32.xlu0 %v522
    %v879 = vpop.xlane.xlu0 %878
    %880 = vmax.xlane.f32.xlu0 %v523
    %v881 = vpop.xlane.xlu0 %880
    %882 = vmax.xlane.f32.xlu0 %v524
    %v883 = vpop.xlane.xlu0 %882
    %884 = vmax.xlane.f32.xlu0 %v525
    %v885 = vpop.xlane.xlu0 %884
    %886 = vmax.xlane.f32.xlu0 %v526
    %v887 = vpop.xlane.xlu0 %886
    %888 = vmax.xlane.f32.xlu0 %v527
    %v889 = vpop.xlane.xlu0 %888
    %890 = vmax.xlane.f32.xlu0 %v528
    %v891 = vpop.xlane.xlu0 %890
    %892 = vmax.xlane.f32.xlu0 %v529
    %v893 = vpop.xlane.xlu0 %892
    %894 = vmax.xlane.f32.xlu0 %v530
    %v895 = vpop.xlane.xlu0 %894
    %896 = vmax.xlane.f32.xlu0 %v531
    %v897 = vpop.xlane.xlu0 %896
    %898 = vmax.xlane.f32.xlu0 %v532
    %v899 = vpop.xlane.xlu0 %898
    %900 = vmax.xlane.f32.xlu0 %v533
    %v901 = vpop.xlane.xlu0 %900
    %902 = vmax.xlane.f32.xlu0 %v550
    %v903 = vpop.xlane.xlu0 %902
    %904 = vmax.xlane.f32.xlu0 %v551
    %v905 = vpop.xlane.xlu0 %904
    %906 = vmax.xlane.f32.xlu0 %v552
    %v907 = vpop.xlane.xlu0 %906
    %908 = vmax.xlane.f32.xlu0 %v553
    %v909 = vpop.xlane.xlu0 %908
    %910 = vmax.xlane.f32.xlu0 %v554
    %v911 = vpop.xlane.xlu0 %910
    %912 = vmax.xlane.f32.xlu0 %v555
    %v913 = vpop.xlane.xlu0 %912
    %914 = vmax.xlane.f32.xlu0 %v556
    %v915 = vpop.xlane.xlu0 %914
    %916 = vmax.xlane.f32.xlu0 %v557
    %v917 = vpop.xlane.xlu0 %916
    %918 = vmax.xlane.f32.xlu0 %v558
    %v919 = vpop.xlane.xlu0 %918
    %920 = vmax.xlane.f32.xlu0 %v559
    %v921 = vpop.xlane.xlu0 %920
    %922 = vmax.xlane.f32.xlu0 %v560
    %v923 = vpop.xlane.xlu0 %922
    %924 = vmax.xlane.f32.xlu0 %v561
    %v925 = vpop.xlane.xlu0 %924
    %926 = vmax.xlane.f32.xlu0 %v562
    %v927 = vpop.xlane.xlu0 %926
    %928 = vmax.xlane.f32.xlu0 %v563
    %v929 = vpop.xlane.xlu0 %928
    %930 = vmax.xlane.f32.xlu0 %v564
    %v931 = vpop.xlane.xlu0 %930
    %932 = vmax.xlane.f32.xlu0 %v565
    %v933 = vpop.xlane.xlu0 %932
    %v934 = vmax.f32 %v871, %v903
    %v935 = vmax.f32 %v873, %v905
    %v936 = vmax.f32 %v875, %v907
    %v937 = vmax.f32 %v877, %v909
    %v938 = vmax.f32 %v879, %v911
    %v939 = vmax.f32 %v881, %v913
    %v940 = vmax.f32 %v883, %v915
    %v941 = vmax.f32 %v885, %v917
    %v942 = vmax.f32 %v887, %v919
    %v943 = vmax.f32 %v889, %v921
    %v944 = vmax.f32 %v891, %v923
    %v945 = vmax.f32 %v893, %v925
    %v946 = vmax.f32 %v895, %v927
    %v947 = vmax.f32 %v897, %v929
    %v948 = vmax.f32 %v899, %v931
    %v949 = vmax.f32 %v901, %v933
    %v950 = vsub.f32 %v518, %v934
    %v951 = vsub.f32 %v519, %v935
    %v952 = vsub.f32 %v520, %v936
    %v953 = vsub.f32 %v521, %v937
    %v954 = vsub.f32 %v522, %v938
    %v955 = vsub.f32 %v523, %v939
    %v956 = vsub.f32 %v524, %v940
    %v957 = vsub.f32 %v525, %v941
    %v958 = vsub.f32 %v526, %v942
    %v959 = vsub.f32 %v527, %v943
    %v960 = vsub.f32 %v528, %v944
    %v961 = vsub.f32 %v529, %v945
    %v962 = vsub.f32 %v530, %v946
    %v963 = vsub.f32 %v531, %v947
    %v964 = vsub.f32 %v532, %v948
    %v965 = vsub.f32 %v533, %v949
    %v966 = vmul.f32 %v950, 1.442695
    %v967 = vpow.pop %v966
    %v968 = vmul.f32 %v951, 1.442695
    %v969 = vpow.pop %v968
    %v970 = vmul.f32 %v952, 1.442695
    %v971 = vpow.pop %v970
    %v972 = vmul.f32 %v953, 1.442695
    %v973 = vpow.pop %v972
    %v974 = vmul.f32 %v954, 1.442695
    %v975 = vpow.pop %v974
    %v976 = vmul.f32 %v955, 1.442695
    %v977 = vpow.pop %v976
    %v978 = vmul.f32 %v956, 1.442695
    %v979 = vpow.pop %v978
    %v980 = vmul.f32 %v957, 1.442695
    %v981 = vpow.pop %v980
    %v982 = vmul.f32 %v958, 1.442695
    %v983 = vpow.pop %v982
    %v984 = vmul.f32 %v959, 1.442695
    %v985 = vpow.pop %v984
    %v986 = vmul.f32 %v960, 1.442695
    %v987 = vpow.pop %v986
    %v988 = vmul.f32 %v961, 1.442695
    %v989 = vpow.pop %v988
    %v990 = vmul.f32 %v962, 1.442695
    %v991 = vpow.pop %v990
    %v992 = vmul.f32 %v963, 1.442695
    %v993 = vpow.pop %v992
    %v994 = vmul.f32 %v964, 1.442695
    %v995 = vpow.pop %v994
    %v996 = vmul.f32 %v965, 1.442695
    %v997 = vpow.pop %v996
    %998 = vadd.xlane.f32.xlu0 %v967
    %v999 = vpop.xlane.xlu0 %998
    %1000 = vadd.xlane.f32.xlu0 %v969
    %v1001 = vpop.xlane.xlu0 %1000
    %1002 = vadd.xlane.f32.xlu0 %v971
    %v1003 = vpop.xlane.xlu0 %1002
    %1004 = vadd.xlane.f32.xlu0 %v973
    %v1005 = vpop.xlane.xlu0 %1004
    %1006 = vadd.xlane.f32.xlu0 %v975
    %v1007 = vpop.xlane.xlu0 %1006
    %1008 = vadd.xlane.f32.xlu0 %v977
    %v1009 = vpop.xlane.xlu0 %1008
    %1010 = vadd.xlane.f32.xlu0 %v979
    %v1011 = vpop.xlane.xlu0 %1010
    %1012 = vadd.xlane.f32.xlu0 %v981
    %v1013 = vpop.xlane.xlu0 %1012
    %1014 = vadd.xlane.f32.xlu0 %v983
    %v1015 = vpop.xlane.xlu0 %1014
    %1016 = vadd.xlane.f32.xlu0 %v985
    %v1017 = vpop.xlane.xlu0 %1016
    %1018 = vadd.xlane.f32.xlu0 %v987
    %v1019 = vpop.xlane.xlu0 %1018
    %1020 = vadd.xlane.f32.xlu0 %v989
    %v1021 = vpop.xlane.xlu0 %1020
    %1022 = vadd.xlane.f32.xlu0 %v991
    %v1023 = vpop.xlane.xlu0 %1022
    %1024 = vadd.xlane.f32.xlu0 %v993
    %v1025 = vpop.xlane.xlu0 %1024
    %1026 = vadd.xlane.f32.xlu0 %v995
    %v1027 = vpop.xlane.xlu0 %1026
    %1028 = vadd.xlane.f32.xlu0 %v997
    %v1029 = vpop.xlane.xlu0 %1028
    %v1030 = vsub.f32 %v550, %v934
    %v1031 = vsub.f32 %v551, %v935
    %v1032 = vsub.f32 %v552, %v936
    %v1033 = vsub.f32 %v553, %v937
    %v1034 = vsub.f32 %v554, %v938
    %v1035 = vsub.f32 %v555, %v939
    %v1036 = vsub.f32 %v556, %v940
    %v1037 = vsub.f32 %v557, %v941
    %v1038 = vsub.f32 %v558, %v942
    %v1039 = vsub.f32 %v559, %v943
    %v1040 = vsub.f32 %v560, %v944
    %v1041 = vsub.f32 %v561, %v945
    %v1042 = vsub.f32 %v562, %v946
    %v1043 = vsub.f32 %v563, %v947
    %v1044 = vsub.f32 %v564, %v948
    %v1045 = vsub.f32 %v565, %v949
    %v1046 = vmul.f32 %v1030, 1.442695
    %v1047 = vpow.pop %v1046
    %v1048 = vmul.f32 %v1031, 1.442695
    %v1049 = vpow.pop %v1048
    %v1050 = vmul.f32 %v1032, 1.442695
    %v1051 = vpow.pop %v1050
    %v1052 = vmul.f32 %v1033, 1.442695
    %v1053 = vpow.pop %v1052
    %v1054 = vmul.f32 %v1034, 1.442695
    %v1055 = vpow.pop %v1054
    %v1056 = vmul.f32 %v1035, 1.442695
    %v1057 = vpow.pop %v1056
    %v1058 = vmul.f32 %v1036, 1.442695
    %v1059 = vpow.pop %v1058
    %v1060 = vmul.f32 %v1037, 1.442695
    %v1061 = vpow.pop %v1060
    %v1062 = vmul.f32 %v1038, 1.442695
    %v1063 = vpow.pop %v1062
    %v1064 = vmul.f32 %v1039, 1.442695
    %v1065 = vpow.pop %v1064
    %v1066 = vmul.f32 %v1040, 1.442695
    %v1067 = vpow.pop %v1066
    %v1068 = vmul.f32 %v1041, 1.442695
    %v1069 = vpow.pop %v1068
    %v1070 = vmul.f32 %v1042, 1.442695
    %v1071 = vpow.pop %v1070
    %v1072 = vmul.f32 %v1043, 1.442695
    %v1073 = vpow.pop %v1072
    %v1074 = vmul.f32 %v1044, 1.442695
    %v1075 = vpow.pop %v1074
    %v1076 = vmul.f32 %v1045, 1.442695
    %v1077 = vpow.pop %v1076
    %1078 = vadd.xlane.f32.xlu0 %v1047
    %v1079 = vpop.xlane.xlu0 %1078
    %1080 = vadd.xlane.f32.xlu0 %v1049
    %v1081 = vpop.xlane.xlu0 %1080
    %1082 = vadd.xlane.f32.xlu0 %v1051
    %v1083 = vpop.xlane.xlu0 %1082
    %1084 = vadd.xlane.f32.xlu0 %v1053
    %v1085 = vpop.xlane.xlu0 %1084
    %1086 = vadd.xlane.f32.xlu0 %v1055
    %v1087 = vpop.xlane.xlu0 %1086
    %1088 = vadd.xlane.f32.xlu0 %v1057
    %v1089 = vpop.xlane.xlu0 %1088
    %1090 = vadd.xlane.f32.xlu0 %v1059
    %v1091 = vpop.xlane.xlu0 %1090
    %1092 = vadd.xlane.f32.xlu0 %v1061
    %v1093 = vpop.xlane.xlu0 %1092
    %1094 = vadd.xlane.f32.xlu0 %v1063
    %v1095 = vpop.xlane.xlu0 %1094
    %1096 = vadd.xlane.f32.xlu0 %v1065
    %v1097 = vpop.xlane.xlu0 %1096
    %1098 = vadd.xlane.f32.xlu0 %v1067
    %v1099 = vpop.xlane.xlu0 %1098
    %1100 = vadd.xlane.f32.xlu0 %v1069
    %v1101 = vpop.xlane.xlu0 %1100
    %1102 = vadd.xlane.f32.xlu0 %v1071
    %v1103 = vpop.xlane.xlu0 %1102
    %1104 = vadd.xlane.f32.xlu0 %v1073
    %v1105 = vpop.xlane.xlu0 %1104
    %1106 = vadd.xlane.f32.xlu0 %v1075
    %v1107 = vpop.xlane.xlu0 %1106
    %1108 = vadd.xlane.f32.xlu0 %v1077
    %v1109 = vpop.xlane.xlu0 %1108
    %v1110 = vadd.f32 %v999, %v1079
    %v1111 = vadd.f32 %v1001, %v1081
    %v1112 = vadd.f32 %v1003, %v1083
    %v1113 = vadd.f32 %v1005, %v1085
    %v1114 = vadd.f32 %v1007, %v1087
    %v1115 = vadd.f32 %v1009, %v1089
    %v1116 = vadd.f32 %v1011, %v1091
    %v1117 = vadd.f32 %v1013, %v1093
    %v1118 = vadd.f32 %v1015, %v1095
    %v1119 = vadd.f32 %v1017, %v1097
    %v1120 = vadd.f32 %v1019, %v1099
    %v1121 = vadd.f32 %v1021, %v1101
    %v1122 = vadd.f32 %v1023, %v1103
    %v1123 = vadd.f32 %v1025, %v1105
    %v1124 = vadd.f32 %v1027, %v1107
    %v1125 = vadd.f32 %v1029, %v1109
    %v1126 = vlog2.pop %v1110
    %v1127 = vmul.f32 %v1126, 0.6931472
    %v1128 = vlog2.pop %v1111
    %v1129 = vmul.f32 %v1128, 0.6931472
    %v1130 = vlog2.pop %v1112
    %v1131 = vmul.f32 %v1130, 0.6931472
    %v1132 = vlog2.pop %v1113
    %v1133 = vmul.f32 %v1132, 0.6931472
    %v1134 = vlog2.pop %v1114
    %v1135 = vmul.f32 %v1134, 0.6931472
    %v1136 = vlog2.pop %v1115
    %v1137 = vmul.f32 %v1136, 0.6931472
    %v1138 = vlog2.pop %v1116
    %v1139 = vmul.f32 %v1138, 0.6931472
    %v1140 = vlog2.pop %v1117
    %v1141 = vmul.f32 %v1140, 0.6931472
    %v1142 = vlog2.pop %v1118
    %v1143 = vmul.f32 %v1142, 0.6931472
    %v1144 = vlog2.pop %v1119
    %v1145 = vmul.f32 %v1144, 0.6931472
    %v1146 = vlog2.pop %v1120
    %v1147 = vmul.f32 %v1146, 0.6931472
    %v1148 = vlog2.pop %v1121
    %v1149 = vmul.f32 %v1148, 0.6931472
    %v1150 = vlog2.pop %v1122
    %v1151 = vmul.f32 %v1150, 0.6931472
    %v1152 = vlog2.pop %v1123
    %v1153 = vmul.f32 %v1152, 0.6931472
    %v1154 = vlog2.pop %v1124
    %v1155 = vmul.f32 %v1154, 0.6931472
    %v1156 = vlog2.pop %v1125
    %v1157 = vmul.f32 %v1156, 0.6931472
    %v1158 = vadd.f32 %v934, %v1127
    %v1159 = vadd.f32 %v935, %v1129
    %v1160 = vadd.f32 %v936, %v1131
    %v1161 = vadd.f32 %v937, %v1133
    %v1162 = vadd.f32 %v938, %v1135
    %v1163 = vadd.f32 %v939, %v1137
    %v1164 = vadd.f32 %v940, %v1139
    %v1165 = vadd.f32 %v941, %v1141
    %v1166 = vadd.f32 %v942, %v1143
    %v1167 = vadd.f32 %v943, %v1145
    %v1168 = vadd.f32 %v944, %v1147
    %v1169 = vadd.f32 %v945, %v1149
    %v1170 = vadd.f32 %v946, %v1151
    %v1171 = vadd.f32 %v947, %v1153
    %v1172 = vadd.f32 %v948, %v1155
    %v1173 = vadd.f32 %v949, %v1157
    %vm1174 = vcmp.lt.s32.totalorder %v451, 8
    %vm1175 = vcmp.lt.s32.totalorder %v452, 8
    %vm1176 = vcmp.lt.s32.totalorder %v453, 8
    %vm1177 = vcmp.lt.s32.totalorder %v454, 8
    %vm1178 = vcmp.lt.s32.totalorder %v455, 8
    %vm1179 = vcmp.lt.s32.totalorder %v456, 8
    %vm1180 = vcmp.lt.s32.totalorder %v457, 8
    %vm1181 = vcmp.lt.s32.totalorder %v458, 8
    %vm1182 = vcmp.lt.s32.totalorder %v459, 8
    %vm1183 = vcmp.lt.s32.totalorder %v460, 8
    %vm1184 = vcmp.lt.s32.totalorder %v461, 8
    %vm1185 = vcmp.lt.s32.totalorder %v462, 8
    %vm1186 = vcmp.lt.s32.totalorder %v463, 8
    %vm1187 = vcmp.lt.s32.totalorder %v464, 8
    %vm1188 = vcmp.lt.s32.totalorder %v465, 8
    %vm1189 = vcmp.lt.s32.totalorder %v466, 8
    %v1190 = vsub.f32 %v854, %v125
    %v1191 = vsub.f32 %v855, %v126
    %v1192 = vsub.f32 %v856, %v127
    %v1193 = vsub.f32 %v857, %v128
    %v1194 = vsub.f32 %v858, %v129
    %v1195 = vsub.f32 %v859, %v130
    %v1196 = vsub.f32 %v860, %v131
    %v1197 = vsub.f32 %v861, %v132
    %v1198 = vsub.f32 %v862, %v133
    %v1199 = vsub.f32 %v863, %v134
    %v1200 = vsub.f32 %v864, %v135
    %v1201 = vsub.f32 %v865, %v136
    %v1202 = vsub.f32 %v866, %v137
    %v1203 = vsub.f32 %v867, %v138
    %v1204 = vsub.f32 %v868, %v139
    %v1205 = vsub.f32 %v869, %v140
    %v1206 = vsel %vm1174, %v1190, 0.0
    %v1207 = vsel %vm1175, %v1191, 0.0
    %v1208 = vsel %vm1176, %v1192, 0.0
    %v1209 = vsel %vm1177, %v1193, 0.0
    %v1210 = vsel %vm1178, %v1194, 0.0
    %v1211 = vsel %vm1179, %v1195, 0.0
    %v1212 = vsel %vm1180, %v1196, 0.0
    %v1213 = vsel %vm1181, %v1197, 0.0
    %v1214 = vsel %vm1182, %v1198, 0.0
    %v1215 = vsel %vm1183, %v1199, 0.0
    %v1216 = vsel %vm1184, %v1200, 0.0
    %v1217 = vsel %vm1185, %v1201, 0.0
    %v1218 = vsel %vm1186, %v1202, 0.0
    %v1219 = vsel %vm1187, %v1203, 0.0
    %v1220 = vsel %vm1188, %v1204, 0.0
    %v1221 = vsel %vm1189, %v1205, 0.0
    %vm1222 = vcmask 7168
    %v1223 = vsel %vm1222, %v1206, 0.0
    %v1224 = vsel %vm1222, %v1207, 0.0
    %v1225 = vadd.f32 %v1223, %v1224
    %v1226 = vsel %vm1222, %v1208, 0.0
    %v1227 = vadd.f32 %v1225, %v1226
    %v1228 = vsel %vm1222, %v1209, 0.0
    %v1229 = vadd.f32 %v1227, %v1228
    %v1230 = vsel %vm1222, %v1210, 0.0
    %v1231 = vadd.f32 %v1229, %v1230
    %v1232 = vsel %vm1222, %v1211, 0.0
    %v1233 = vadd.f32 %v1231, %v1232
    %v1234 = vsel %vm1222, %v1212, 0.0
    %v1235 = vadd.f32 %v1233, %v1234
    %v1236 = vsel %vm1222, %v1213, 0.0
    %v1237 = vadd.f32 %v1235, %v1236
    %v1238 = vsel %vm1222, %v1214, 0.0
    %v1239 = vadd.f32 %v1237, %v1238
    %v1240 = vsel %vm1222, %v1215, 0.0
    %v1241 = vadd.f32 %v1239, %v1240
    %v1242 = vsel %vm1222, %v1216, 0.0
    %v1243 = vadd.f32 %v1241, %v1242
    %v1244 = vsel %vm1222, %v1217, 0.0
    %v1245 = vadd.f32 %v1243, %v1244
    %v1246 = vsel %vm1222, %v1218, 0.0
    %v1247 = vadd.f32 %v1245, %v1246
    %v1248 = vsel %vm1222, %v1219, 0.0
    %v1249 = vadd.f32 %v1247, %v1248
    %v1250 = vsel %vm1222, %v1220, 0.0
    %v1251 = vadd.f32 %v1249, %v1250
    %v1252 = vsel %vm1222, %v1221, 0.0
    %v1253 = vadd.f32 %v1251, %v1252
    %1254 = vadd.xlane.f32.xlu0 %v1253
    %v1255 = vpop.xlane.xlu0 %1254
    %v1256 = vrot.slane %v1255, 4
    %v1257 = vadd.f32 %v1255, %v1256
    %v1258 = vrot.slane %v1257, 2
    %v1259 = vadd.f32 %v1257, %v1258
    %v1260 = vrot.slane %v1259, 1
    %v1261 = vadd.f32 %v1259, %v1260
    %s1262 = vtos %v1261
    %v1263 = vsub.f32 %v1158, %v125
    %v1264 = vsub.f32 %v1159, %v126
    %v1265 = vsub.f32 %v1160, %v127
    %v1266 = vsub.f32 %v1161, %v128
    %v1267 = vsub.f32 %v1162, %v129
    %v1268 = vsub.f32 %v1163, %v130
    %v1269 = vsub.f32 %v1164, %v131
    %v1270 = vsub.f32 %v1165, %v132
    %v1271 = vsub.f32 %v1166, %v133
    %v1272 = vsub.f32 %v1167, %v134
    %v1273 = vsub.f32 %v1168, %v135
    %v1274 = vsub.f32 %v1169, %v136
    %v1275 = vsub.f32 %v1170, %v137
    %v1276 = vsub.f32 %v1171, %v138
    %v1277 = vsub.f32 %v1172, %v139
    %v1278 = vsub.f32 %v1173, %v140
    %v1279 = vsel %vm1174, %v1263, 0.0
    %v1280 = vsel %vm1175, %v1264, 0.0
    %v1281 = vsel %vm1176, %v1265, 0.0
    %v1282 = vsel %vm1177, %v1266, 0.0
    %v1283 = vsel %vm1178, %v1267, 0.0
    %v1284 = vsel %vm1179, %v1268, 0.0
    %v1285 = vsel %vm1180, %v1269, 0.0
    %v1286 = vsel %vm1181, %v1270, 0.0
    %v1287 = vsel %vm1182, %v1271, 0.0
    %v1288 = vsel %vm1183, %v1272, 0.0
    %v1289 = vsel %vm1184, %v1273, 0.0
    %v1290 = vsel %vm1185, %v1274, 0.0
    %v1291 = vsel %vm1186, %v1275, 0.0
    %v1292 = vsel %vm1187, %v1276, 0.0
    %v1293 = vsel %vm1188, %v1277, 0.0
    %v1294 = vsel %vm1189, %v1278, 0.0
    %v1295 = vsel %vm1222, %v1279, 0.0
    %v1296 = vsel %vm1222, %v1280, 0.0
    %v1297 = vadd.f32 %v1295, %v1296
    %v1298 = vsel %vm1222, %v1281, 0.0
    %v1299 = vadd.f32 %v1297, %v1298
    %v1300 = vsel %vm1222, %v1282, 0.0
    %v1301 = vadd.f32 %v1299, %v1300
    %v1302 = vsel %vm1222, %v1283, 0.0
    %v1303 = vadd.f32 %v1301, %v1302
    %v1304 = vsel %vm1222, %v1284, 0.0
    %v1305 = vadd.f32 %v1303, %v1304
    %v1306 = vsel %vm1222, %v1285, 0.0
    %v1307 = vadd.f32 %v1305, %v1306
    %v1308 = vsel %vm1222, %v1286, 0.0
    %v1309 = vadd.f32 %v1307, %v1308
    %v1310 = vsel %vm1222, %v1287, 0.0
    %v1311 = vadd.f32 %v1309, %v1310
    %v1312 = vsel %vm1222, %v1288, 0.0
    %v1313 = vadd.f32 %v1311, %v1312
    %v1314 = vsel %vm1222, %v1289, 0.0
    %v1315 = vadd.f32 %v1313, %v1314
    %v1316 = vsel %vm1222, %v1290, 0.0
    %v1317 = vadd.f32 %v1315, %v1316
    %v1318 = vsel %vm1222, %v1291, 0.0
    %v1319 = vadd.f32 %v1317, %v1318
    %v1320 = vsel %vm1222, %v1292, 0.0
    %v1321 = vadd.f32 %v1319, %v1320
    %v1322 = vsel %vm1222, %v1293, 0.0
    %v1323 = vadd.f32 %v1321, %v1322
    %v1324 = vsel %vm1222, %v1294, 0.0
    %v1325 = vadd.f32 %v1323, %v1324
    %1326 = vadd.xlane.f32.xlu0 %v1325
    %v1327 = vpop.xlane.xlu0 %1326
    %v1328 = vrot.slane %v1327, 4
    %v1329 = vadd.f32 %v1327, %v1328
    %v1330 = vrot.slane %v1329, 2
    %v1331 = vadd.f32 %v1329, %v1330
    %v1332 = vrot.slane %v1331, 1
    %v1333 = vadd.f32 %v1331, %v1332
    %s1334 = vtos %v1333
    %s1335 = smul.f32 %s1262, 0.5
    %s1336 = smul.f32 %s1334, 0.5
    %s1337 = sadd.f32 %s1335, %s1336
    %s1338 = smul.f32 %s1337, 0.125
    %v1339 = vstv %s1338
    %1340 = vst [vmem:[#allocation7] sm:$0xff] %v1339
    // Predicated region
    $region18: #{tpu_custom_call.1} parent=1 // pred_check
      _
    $region19: #{tpu_custom_call.1} parent=1 // pred_check_branch
      %1342 = sbr.rel (0) target = $region21
    $region20: #{tpu_custom_call.1} parent=1 // pred_region
      %1344 = vsyncadd [#allocation4], 0
      %s1346 = sshll.u32 [#allocation7], 4
      %s1347 = int_to_ptr.vmem [resolvable:$true] %s1346
      %s1348 = sshll.u32 %s2, 4
      %s1349 = int_to_ptr.hbm [resolvable:$true] %s1348
      %1351 = dma.vmem_to_hbm [thread:$0]  %s1347, 128, %s1349, [#allocation4]
    $region21: #{tpu_custom_call.1} parent=1 // pred_fallthru
      _
    // Predicated region
    $region22: #{tpu_custom_call.1} parent=1 // pred_check
      _
    $region23: #{tpu_custom_call.1} parent=1 // pred_check_branch
      %1353 = sbr.rel (0) target = $region25
    $region24: #{tpu_custom_call.1} parent=1 // pred_region
      %1355 = dma.done [#allocation4], 128
    $region25: #{tpu_custom_call.1} parent=1 // pred_fallthru
      _
    %1356 = vsyncpa [#allocation3], 1
    %1357 = vsyncpa [#allocation6], 1
    %1358 = vsyncpa [#allocation4], 1

</llo_original>
